<compile_context>
chip_gen: v5e
topology: v5e:2x2
jax: 0.10.0
libtpu: 0.0.40
codegen_flags: <defaults>
</compile_context>

<pallas_src>
import jax
import jax.numpy as jnp
from jax.experimental import pallas as pl
from jax.experimental.pallas import tpu as pltpu

LANE = 128
SUBLANE = 8


def _round_up(n, m):
    return ((n + m - 1) // m) * m


# ---------------------------------------------------------------------------
# Pallas kernels
# ---------------------------------------------------------------------------
def _conv_relu_pool_kernel(p_ref, w_ref, b_ref, o_ref):
    """Fused conv(im2col matmul) + bias + ReLU + MaxPool2d(2,2).

    p_ref: (4, Mpad, Kpad)  im2col patches, split by 2x2 pool-window corner
    w_ref: (Kpad, Npad)     conv weight (K = Cin*Kh*Kw zero-padded, N = Cout padded)
    b_ref: (1, Npad)        conv bias (zero-padded)
    o_ref: (Mpad, Npad)     pooled activations, rows ordered (b, hp, wp)
    """
    w = w_ref[...]
    # 4 MXU matmuls (one per pool-window corner); the 2x2 max-pool is just the
    # elementwise max of the four partial results (VPU).
    s = jnp.dot(p_ref[0], w, preferred_element_type=jnp.float32)
    for c in range(1, 4):  # static unroll
        s = jnp.maximum(s, jnp.dot(p_ref[c], w, preferred_element_type=jnp.float32))
    # bias + ReLU commute with the max (per-column bias, ReLU monotone), so
    # apply them once on the pooled result instead of 4x per corner.
    o_ref[...] = jnp.maximum(s + b_ref[...], 0.0).astype(o_ref.dtype)


def _mlp3_kernel(x_ref, w1_ref, b1_ref, w2_ref, b2_ref, w3_ref, b3_ref, o_ref):
    """fc1+ReLU -> fc2+ReLU -> fc3, fully fused; intermediates stay in vregs/VMEM."""
    h = jnp.dot(x_ref[...], w1_ref[...], preferred_element_type=jnp.float32)
    h = jnp.maximum(h + b1_ref[...], 0.0)
    h = jnp.dot(h, w2_ref[...], preferred_element_type=jnp.float32)
    h = jnp.maximum(h + b2_ref[...], 0.0)
    h = jnp.dot(h, w3_ref[...], preferred_element_type=jnp.float32)
    o_ref[...] = (h + b3_ref[...]).astype(o_ref.dtype)


# ---------------------------------------------------------------------------
# Wrappers
# ---------------------------------------------------------------------------
def conv_relu_pool(x, w_pad, b_pad, kh=5, kw=5):
    """x: (B, Cin, H, W) f32 NCHW.  Returns (B, Hp, Wp, Npad) NHWC with channels
    zero-padded to Npad=128; cols [:Cout] equal pool(relu(conv(x) + b))."""
    B, Cin, H, W = x.shape
    Ho, Wo = H - kh + 1, W - kw + 1
    Hp, Wp = Ho // 2, Wo // 2          # MaxPool2d(2,2) floor behaviour
    K = Cin * kh * kw
    Kpad, Npad = w_pad.shape
    Mp = B * Hp * Wp
    Mpad = _round_up(Mp, SUBLANE)      # sublane-aligned M -> unmasked stores

    # --- im2col glue (XLA fuses this into one gather feeding the kernel) ----
    # feature order = (cin, i, j), matching torch weight.reshape(Cout, Cin*Kh*Kw)
    patches = [x[:, :, i:i + Ho, j:j + Wo] for i in range(kh) for j in range(kw)]
    p = jnp.stack(patches, axis=2).reshape(B, K, Ho, Wo)
    # split spatial positions into the four 2x2-pool-window corners (corner-major)
    p = p[:, :, :2 * Hp, :2 * Wp].reshape(B, K, Hp, 2, Wp, 2)
    p = p.transpose(3, 5, 0, 2, 4, 1).reshape(4, Mp, K)    # (corner, row, feature)
    p = jnp.pad(p, ((0, 0), (0, Mpad - Mp), (0, Kpad - K)))  # align M & K

    out = pl.pallas_call(
        _conv_relu_pool_kernel,
        out_shape=jax.ShapeDtypeStruct((Mpad, Npad), jnp.float32),
        grid=(1,),
        in_specs=[
            pl.BlockSpec((4, Mpad, Kpad), lambda i: (0, 0, 0)),
            pl.BlockSpec((Kpad, Npad), lambda i: (0, 0)),
            pl.BlockSpec((1, Npad), lambda i: (0, 0)),
        ],
        out_specs=pl.BlockSpec((Mpad, Npad), lambda i: (0, 0)),
        compiler_params=pltpu.CompilerParams(dimension_semantics=("arbitrary",)),
    )(p, w_pad, b_pad)
    return out[:Mp].reshape(B, Hp, Wp, Npad)


def mlp3(x, w1, b1, w2, b2, w3, b3):
    """x: (B, F) f32.  Single fused kernel for fc1/fc2/fc3 (+ReLUs)."""
    B, F = x.shape
    Bpad = _round_up(B, SUBLANE)
    Kpad = w1.shape[0]
    Npad = w3.shape[1]
    x = jnp.pad(x, ((0, Bpad - B), (0, Kpad - F)))   # align M (sublanes) & K (lanes)

    out = pl.pallas_call(
        _mlp3_kernel,
        out_shape=jax.ShapeDtypeStruct((Bpad, Npad), jnp.float32),
        grid=(1,),
        in_specs=[pl.BlockSpec(a.shape, lambda i: (0, 0))
                  for a in (x, w1, b1, w2, b2, w3, b3)],
        out_specs=pl.BlockSpec((Bpad, Npad), lambda i: (0, 0)),
        compiler_params=pltpu.CompilerParams(dimension_semantics=("arbitrary",)),
    )(x, w1, b1, w2, b2, w3, b3)
    return out[:B]


# ---------------------------------------------------------------------------
# Parameters
# ---------------------------------------------------------------------------
def init_params(key):
    """Synthetic params; shapes mirror the PyTorch module (Linear = (out, in))."""
    keys = jax.random.split(key, 10)

    def uni(k, shape, fan_in):
        bound = 1.0 / jnp.sqrt(fan_in)
        return jax.random.uniform(k, shape, jnp.float32, -bound, bound)

    return {
        "conv1_w": uni(keys[0], (6, 3, 5, 5), 3 * 5 * 5),
        "conv1_b": uni(keys[1], (6,), 3 * 5 * 5),
        "conv2_w": uni(keys[2], (16, 6, 5, 5), 6 * 5 * 5),
        "conv2_b": uni(keys[3], (16,), 6 * 5 * 5),
        "fc1_w": uni(keys[4], (120, 400), 400),
        "fc1_b": uni(keys[5], (120,), 400),
        "fc2_w": uni(keys[6], (84, 120), 120),
        "fc2_b": uni(keys[7], (84,), 120),
        "fc3_w": uni(keys[8], (10, 84), 84),
        "fc3_b": uni(keys[9], (10,), 84),
    }


def prepare_params(params):
    """One-time (outside jit) reshape/transpose/zero-pad of all weights into
    MXU-friendly (K, N) layouts with K and N aligned to 128 lanes."""
    def pad2(a, kt, nt):
        return jnp.pad(a, ((0, kt - a.shape[0]), (0, nt - a.shape[1])))

    def padb(b):
        return jnp.pad(b, (0, LANE - b.shape[0])).reshape(1, LANE)

    c1 = params["conv1_w"].reshape(6, 3 * 25).T      # (75, 6), feature order (ci,i,j)
    c2 = params["conv2_w"].reshape(16, 6 * 25).T     # (150, 16)
    return {
        "c1w": pad2(c1, _round_up(75, LANE), LANE), "c1b": padb(params["conv1_b"]),
        "c2w": pad2(c2, _round_up(150, LANE), LANE), "c2b": padb(params["conv2_b"]),
        "f1w": pad2(params["fc1_w"].T, _round_up(400, LANE), LANE), "f1b": padb(params["fc1_b"]),
        "f2w": pad2(params["fc2_w"].T, LANE, LANE), "f2b": padb(params["fc2_b"]),
        "f3w": pad2(params["fc3_w"].T, LANE, LANE), "f3b": padb(params["fc3_b"]),
    }


# ---------------------------------------------------------------------------
# Forward pass (matches PyTorch NeuralNet.forward)
# ---------------------------------------------------------------------------
@jax.jit
def neural_net_forward(x, prep):
    B = x.shape[0]
    h = conv_relu_pool(x, prep["c1w"], prep["c1b"])             # (B,14,14,128), cols[:6]
    h = h[..., :6].transpose(0, 3, 1, 2)                        # (B,6,14,14) NCHW
    h = conv_relu_pool(h, prep["c2w"], prep["c2b"])             # (B,5,5,128), cols[:16]
    h = h[..., :16].transpose(0, 3, 1, 2).reshape(B, 400)       # torch flatten order (c,h,w)
    out = mlp3(h, prep["f1w"], prep["f1b"], prep["f2w"], prep["f2b"],
               prep["f3w"], prep["f3b"])
    return out[:, :10]


# ---------------------------------------------------------------------------
# Pure-JAX reference (sanity check against the kernels)
# ---------------------------------------------------------------------------
def _reference_forward(x, params):
    def conv(h, w, b):
        y = jax.lax.conv_general_dilated(
            h, w, window_strides=(1, 1), padding="VALID",
            dimension_numbers=("NCHW", "OIHW", "NCHW"),
            precision=jax.lax.Precision.HIGHEST)
        return y + b[None, :, None, None]

    def pool(h):
        B, C, H, W = h.shape
        h = h[:, :, :H // 2 * 2, :W // 2 * 2].reshape(B, C, H // 2, 2, W // 2, 2)
        return h.max(axis=(3, 5))

    h = pool(jax.nn.relu(conv(x, params["conv1_w"], params["conv1_b"])))
    h = pool(jax.nn.relu(conv(h, params["conv2_w"], params["conv2_b"])))
    h = h.reshape(h.shape[0], -1)
    h = jax.nn.relu(h @ params["fc1_w"].T + params["fc1_b"])
    h = jax.nn.relu(h @ params["fc2_w"].T + params["fc2_b"])
    return h @ params["fc3_w"].T + params["fc3_b"]


if __name__ == "__main__":
    key = jax.random.PRNGKey(0)
    k_x, k_p = jax.random.split(key)
    # CIFAR-10 sized input is required by the module: fc1 expects 16*5*5 => 3x32x32.
    x = jax.random.normal(k_x, (2, 3, 32, 32), jnp.float32)
    params = init_params(k_p)
    prep = prepare_params(params)          # one-time weight prep, outside jit

    out = neural_net_forward(x, prep)
    out = jax.block_until_ready(out)
    assert out.shape == (2, 10), out.shape
    assert bool(jnp.all(jnp.isfinite(out)))

    ref = _reference_forward(x, params)
    max_err = float(jnp.max(jnp.abs(out - ref)))
    # generous tolerance: guards layout/ordering bugs, ignores MXU precision noise
    assert max_err < 5e-2, f"max abs error vs reference: {max_err}"

    print("KERNEL_OK")
</pallas_src>

<mosaic_0001>
module attributes {stable_mosaic.version = 11 : i64} {
  func.func @_conv_relu_pool_kernel(%arg0: i32, %arg1: memref<4x392x128xf32, #tpu.memory_space<vmem>>, %arg2: memref<128x128xf32, #tpu.memory_space<vmem>>, %arg3: memref<1x128xf32, #tpu.memory_space<vmem>>, %arg4: memref<392x128xf32, #tpu.memory_space<vmem>>) attributes {dimension_semantics = [#tpu.dimension_semantics<arbitrary>], iteration_bounds = array<i64: 1>, scalar_prefetch = 0 : i64, scratch_operands = 0 : i64, tpu.core_type = #tpu.core_type<tc>, window_params = [{pipeline_mode = #tpu.pipeline_mode<synchronous>, transform_indices = @transform_0, window_bounds = array<i64: 4, 392, 128>}, {pipeline_mode = #tpu.pipeline_mode<synchronous>, transform_indices = @transform_1, window_bounds = array<i64: 128, 128>}, {pipeline_mode = #tpu.pipeline_mode<synchronous>, transform_indices = @transform_2, window_bounds = array<i64: 1, 128>}, {pipeline_mode = #tpu.pipeline_mode<synchronous>, transform_indices = @transform_3, window_bounds = array<i64: 392, 128>}]} {
    %c0 = arith.constant 0 : index
    %c0_0 = arith.constant 0 : index
    %0 = vector.load %arg2[%c0, %c0_0] : memref<128x128xf32, #tpu.memory_space<vmem>>, vector<128x128xf32>
    %c0_1 = arith.constant 0 : index
    %c0_2 = arith.constant 0 : index
    %c0_3 = arith.constant 0 : index
    %1 = vector.load %arg1[%c0_1, %c0_2, %c0_3] : memref<4x392x128xf32, #tpu.memory_space<vmem>>, vector<1x392x128xf32>
    %2 = vector.shape_cast %1 : vector<1x392x128xf32> to vector<392x128xf32>
    %cst = arith.constant dense<0.000000e+00> : vector<392x128xf32>
    %3 = tpu.matmul %2, %0, %cst {dimension_numbers = #tpu.dot_dimension_numbers<[1], [0], [0], [1], [0, 0, 1, 1], [], []>} : vector<392x128xf32>, vector<128x128xf32>, vector<392x128xf32> -> vector<392x128xf32>
    %c1 = arith.constant 1 : index
    %c0_4 = arith.constant 0 : index
    %c0_5 = arith.constant 0 : index
    %4 = vector.load %arg1[%c1, %c0_4, %c0_5] : memref<4x392x128xf32, #tpu.memory_space<vmem>>, vector<1x392x128xf32>
    %5 = vector.shape_cast %4 : vector<1x392x128xf32> to vector<392x128xf32>
    %cst_6 = arith.constant dense<0.000000e+00> : vector<392x128xf32>
    %6 = tpu.matmul %5, %0, %cst_6 {dimension_numbers = #tpu.dot_dimension_numbers<[1], [0], [0], [1], [0, 0, 1, 1], [], []>} : vector<392x128xf32>, vector<128x128xf32>, vector<392x128xf32> -> vector<392x128xf32>
    %7 = arith.maximumf %3, %6 : vector<392x128xf32>
    %c2 = arith.constant 2 : index
    %c0_7 = arith.constant 0 : index
    %c0_8 = arith.constant 0 : index
    %8 = vector.load %arg1[%c2, %c0_7, %c0_8] : memref<4x392x128xf32, #tpu.memory_space<vmem>>, vector<1x392x128xf32>
    %9 = vector.shape_cast %8 : vector<1x392x128xf32> to vector<392x128xf32>
    %cst_9 = arith.constant dense<0.000000e+00> : vector<392x128xf32>
    %10 = tpu.matmul %9, %0, %cst_9 {dimension_numbers = #tpu.dot_dimension_numbers<[1], [0], [0], [1], [0, 0, 1, 1], [], []>} : vector<392x128xf32>, vector<128x128xf32>, vector<392x128xf32> -> vector<392x128xf32>
    %11 = arith.maximumf %7, %10 : vector<392x128xf32>
    %c3 = arith.constant 3 : index
    %c0_10 = arith.constant 0 : index
    %c0_11 = arith.constant 0 : index
    %12 = vector.load %arg1[%c3, %c0_10, %c0_11] : memref<4x392x128xf32, #tpu.memory_space<vmem>>, vector<1x392x128xf32>
    %13 = vector.shape_cast %12 : vector<1x392x128xf32> to vector<392x128xf32>
    %cst_12 = arith.constant dense<0.000000e+00> : vector<392x128xf32>
    %14 = tpu.matmul %13, %0, %cst_12 {dimension_numbers = #tpu.dot_dimension_numbers<[1], [0], [0], [1], [0, 0, 1, 1], [], []>} : vector<392x128xf32>, vector<128x128xf32>, vector<392x128xf32> -> vector<392x128xf32>
    %15 = arith.maximumf %11, %14 : vector<392x128xf32>
    %c0_13 = arith.constant 0 : index
    %c0_14 = arith.constant 0 : index
    %16 = vector.load %arg3[%c0_13, %c0_14] : memref<1x128xf32, #tpu.memory_space<vmem>>, vector<1x128xf32>
    %17 = vector.broadcast %16 : vector<1x128xf32> to vector<392x128xf32>
    %18 = arith.addf %15, %17 : vector<392x128xf32>
    %cst_15 = arith.constant 0.000000e+00 : f32
    %19 = vector.broadcast %cst_15 : f32 to vector<392x128xf32>
    %20 = arith.maximumf %18, %19 : vector<392x128xf32>
    %c0_16 = arith.constant 0 : index
    %c0_17 = arith.constant 0 : index
    %21 = vector.load %arg4[%c0_16, %c0_17] : memref<392x128xf32, #tpu.memory_space<vmem>>, vector<392x128xf32>
    tpu.vector_store %arg4[%c0_16, %c0_17], %20 {strides = array<i32>} : memref<392x128xf32, #tpu.memory_space<vmem>>, vector<392x128xf32>,
    return
  }
  func.func @transform_0(%arg0: i32) -> (i32, i32, i32) {
    %c0_i32 = arith.constant 0 : i32
    %c0_i32_0 = arith.constant 0 : i32
    %c0_i32_1 = arith.constant 0 : i32
    %c0_i32_2 = arith.constant 0 : i32
    return %c0_i32, %c0_i32_0, %c0_i32_1 : i32, i32, i32
  }
  func.func @transform_1(%arg0: i32) -> (i32, i32) {
    %c0_i32 = arith.constant 0 : i32
    %c0_i32_0 = arith.constant 0 : i32
    %c0_i32_1 = arith.constant 0 : i32
    return %c0_i32, %c0_i32_0 : i32, i32
  }
  func.func @transform_2(%arg0: i32) -> (i32, i32) {
    %c0_i32 = arith.constant 0 : i32
    %c0_i32_0 = arith.constant 0 : i32
    %c0_i32_1 = arith.constant 0 : i32
    return %c0_i32, %c0_i32_0 : i32, i32
  }
  func.func @transform_3(%arg0: i32) -> (i32, i32) {
    %c0_i32 = arith.constant 0 : i32
    %c0_i32_0 = arith.constant 0 : i32
    %c0_i32_1 = arith.constant 0 : i32
    return %c0_i32, %c0_i32_0 : i32, i32
  }
}

module attributes {stable_mosaic.version = 11 : i64} {
  func.func @_conv_relu_pool_kernel(%arg0: i32, %arg1: memref<4x56x256xf32, #tpu.memory_space<vmem>>, %arg2: memref<256x128xf32, #tpu.memory_space<vmem>>, %arg3: memref<1x128xf32, #tpu.memory_space<vmem>>, %arg4: memref<56x128xf32, #tpu.memory_space<vmem>>) attributes {dimension_semantics = [#tpu.dimension_semantics<arbitrary>], iteration_bounds = array<i64: 1>, scalar_prefetch = 0 : i64, scratch_operands = 0 : i64, tpu.core_type = #tpu.core_type<tc>, window_params = [{pipeline_mode = #tpu.pipeline_mode<synchronous>, transform_indices = @transform_0, window_bounds = array<i64: 4, 56, 256>}, {pipeline_mode = #tpu.pipeline_mode<synchronous>, transform_indices = @transform_1, window_bounds = array<i64: 256, 128>}, {pipeline_mode = #tpu.pipeline_mode<synchronous>, transform_indices = @transform_2, window_bounds = array<i64: 1, 128>}, {pipeline_mode = #tpu.pipeline_mode<synchronous>, transform_indices = @transform_3, window_bounds = array<i64: 56, 128>}]} {
    %c0 = arith.constant 0 : index
    %c0_0 = arith.constant 0 : index
    %0 = vector.load %arg2[%c0, %c0_0] : memref<256x128xf32, #tpu.memory_space<vmem>>, vector<256x128xf32>
    %c0_1 = arith.constant 0 : index
    %c0_2 = arith.constant 0 : index
    %c0_3 = arith.constant 0 : index
    %1 = vector.load %arg1[%c0_1, %c0_2, %c0_3] : memref<4x56x256xf32, #tpu.memory_space<vmem>>, vector<1x56x256xf32>
    %2 = vector.shape_cast %1 : vector<1x56x256xf32> to vector<56x256xf32>
    %cst = arith.constant dense<0.000000e+00> : vector<56x128xf32>
    %3 = tpu.matmul %2, %0, %cst {dimension_numbers = #tpu.dot_dimension_numbers<[1], [0], [0], [1], [0, 0, 1, 1], [], []>} : vector<56x256xf32>, vector<256x128xf32>, vector<56x128xf32> -> vector<56x128xf32>
    %c1 = arith.constant 1 : index
    %c0_4 = arith.constant 0 : index
    %c0_5 = arith.constant 0 : index
    %4 = vector.load %arg1[%c1, %c0_4, %c0_5] : memref<4x56x256xf32, #tpu.memory_space<vmem>>, vector<1x56x256xf32>
    %5 = vector.shape_cast %4 : vector<1x56x256xf32> to vector<56x256xf32>
    %cst_6 = arith.constant dense<0.000000e+00> : vector<56x128xf32>
    %6 = tpu.matmul %5, %0, %cst_6 {dimension_numbers = #tpu.dot_dimension_numbers<[1], [0], [0], [1], [0, 0, 1, 1], [], []>} : vector<56x256xf32>, vector<256x128xf32>, vector<56x128xf32> -> vector<56x128xf32>
    %7 = arith.maximumf %3, %6 : vector<56x128xf32>
    %c2 = arith.constant 2 : index
    %c0_7 = arith.constant 0 : index
    %c0_8 = arith.constant 0 : index
    %8 = vector.load %arg1[%c2, %c0_7, %c0_8] : memref<4x56x256xf32, #tpu.memory_space<vmem>>, vector<1x56x256xf32>
    %9 = vector.shape_cast %8 : vector<1x56x256xf32> to vector<56x256xf32>
    %cst_9 = arith.constant dense<0.000000e+00> : vector<56x128xf32>
    %10 = tpu.matmul %9, %0, %cst_9 {dimension_numbers = #tpu.dot_dimension_numbers<[1], [0], [0], [1], [0, 0, 1, 1], [], []>} : vector<56x256xf32>, vector<256x128xf32>, vector<56x128xf32> -> vector<56x128xf32>
    %11 = arith.maximumf %7, %10 : vector<56x128xf32>
    %c3 = arith.constant 3 : index
    %c0_10 = arith.constant 0 : index
    %c0_11 = arith.constant 0 : index
    %12 = vector.load %arg1[%c3, %c0_10, %c0_11] : memref<4x56x256xf32, #tpu.memory_space<vmem>>, vector<1x56x256xf32>
    %13 = vector.shape_cast %12 : vector<1x56x256xf32> to vector<56x256xf32>
    %cst_12 = arith.constant dense<0.000000e+00> : vector<56x128xf32>
    %14 = tpu.matmul %13, %0, %cst_12 {dimension_numbers = #tpu.dot_dimension_numbers<[1], [0], [0], [1], [0, 0, 1, 1], [], []>} : vector<56x256xf32>, vector<256x128xf32>, vector<56x128xf32> -> vector<56x128xf32>
    %15 = arith.maximumf %11, %14 : vector<56x128xf32>
    %c0_13 = arith.constant 0 : index
    %c0_14 = arith.constant 0 : index
    %16 = vector.load %arg3[%c0_13, %c0_14] : memref<1x128xf32, #tpu.memory_space<vmem>>, vector<1x128xf32>
    %17 = vector.broadcast %16 : vector<1x128xf32> to vector<56x128xf32>
    %18 = arith.addf %15, %17 : vector<56x128xf32>
    %cst_15 = arith.constant 0.000000e+00 : f32
    %19 = vector.broadcast %cst_15 : f32 to vector<56x128xf32>
    %20 = arith.maximumf %18, %19 : vector<56x128xf32>
    %c0_16 = arith.constant 0 : index
    %c0_17 = arith.constant 0 : index
    %21 = vector.load %arg4[%c0_16, %c0_17] : memref<56x128xf32, #tpu.memory_space<vmem>>, vector<56x128xf32>
    tpu.vector_store %arg4[%c0_16, %c0_17], %20 {strides = array<i32>} : memref<56x128xf32, #tpu.memory_space<vmem>>, vector<56x128xf32>,
    return
  }
  func.func @transform_0(%arg0: i32) -> (i32, i32, i32) {
    %c0_i32 = arith.constant 0 : i32
    %c0_i32_0 = arith.constant 0 : i32
    %c0_i32_1 = arith.constant 0 : i32
    %c0_i32_2 = arith.constant 0 : i32
    return %c0_i32, %c0_i32_0, %c0_i32_1 : i32, i32, i32
  }
  func.func @transform_1(%arg0: i32) -> (i32, i32) {
    %c0_i32 = arith.constant 0 : i32
    %c0_i32_0 = arith.constant 0 : i32
    %c0_i32_1 = arith.constant 0 : i32
    return %c0_i32, %c0_i32_0 : i32, i32
  }
  func.func @transform_2(%arg0: i32) -> (i32, i32) {
    %c0_i32 = arith.constant 0 : i32
    %c0_i32_0 = arith.constant 0 : i32
    %c0_i32_1 = arith.constant 0 : i32
    return %c0_i32, %c0_i32_0 : i32, i32
  }
  func.func @transform_3(%arg0: i32) -> (i32, i32) {
    %c0_i32 = arith.constant 0 : i32
    %c0_i32_0 = arith.constant 0 : i32
    %c0_i32_1 = arith.constant 0 : i32
    return %c0_i32, %c0_i32_0 : i32, i32
  }
}

module attributes {stable_mosaic.version = 11 : i64} {
  func.func @_mlp3_kernel(%arg0: i32, %arg1: memref<8x512xf32, #tpu.memory_space<vmem>>, %arg2: memref<512x128xf32, #tpu.memory_space<vmem>>, %arg3: memref<1x128xf32, #tpu.memory_space<vmem>>, %arg4: memref<128x128xf32, #tpu.memory_space<vmem>>, %arg5: memref<1x128xf32, #tpu.memory_space<vmem>>, %arg6: memref<128x128xf32, #tpu.memory_space<vmem>>, %arg7: memref<1x128xf32, #tpu.memory_space<vmem>>, %arg8: memref<8x128xf32, #tpu.memory_space<vmem>>) attributes {dimension_semantics = [#tpu.dimension_semantics<arbitrary>], iteration_bounds = array<i64: 1>, scalar_prefetch = 0 : i64, scratch_operands = 0 : i64, tpu.core_type = #tpu.core_type<tc>, window_params = [{pipeline_mode = #tpu.pipeline_mode<synchronous>, transform_indices = @transform_0, window_bounds = array<i64: 8, 512>}, {pipeline_mode = #tpu.pipeline_mode<synchronous>, transform_indices = @transform_1, window_bounds = array<i64: 512, 128>}, {pipeline_mode = #tpu.pipeline_mode<synchronous>, transform_indices = @transform_2, window_bounds = array<i64: 1, 128>}, {pipeline_mode = #tpu.pipeline_mode<synchronous>, transform_indices = @transform_3, window_bounds = array<i64: 128, 128>}, {pipeline_mode = #tpu.pipeline_mode<synchronous>, transform_indices = @transform_4, window_bounds = array<i64: 1, 128>}, {pipeline_mode = #tpu.pipeline_mode<synchronous>, transform_indices = @transform_5, window_bounds = array<i64: 128, 128>}, {pipeline_mode = #tpu.pipeline_mode<synchronous>, transform_indices = @transform_6, window_bounds = array<i64: 1, 128>}, {pipeline_mode = #tpu.pipeline_mode<synchronous>, transform_indices = @transform_7, window_bounds = array<i64: 8, 128>}]} {
    %c0 = arith.constant 0 : index
    %c0_0 = arith.constant 0 : index
    %0 = vector.load %arg1[%c0, %c0_0] : memref<8x512xf32, #tpu.memory_space<vmem>>, vector<8x512xf32>
    %c0_1 = arith.constant 0 : index
    %c0_2 = arith.constant 0 : index
    %1 = vector.load %arg2[%c0_1, %c0_2] : memref<512x128xf32, #tpu.memory_space<vmem>>, vector<512x128xf32>
    %cst = arith.constant dense<0.000000e+00> : vector<8x128xf32>
    %2 = tpu.matmul %0, %1, %cst {dimension_numbers = #tpu.dot_dimension_numbers<[1], [0], [0], [1], [0, 0, 1, 1], [], []>} : vector<8x512xf32>, vector<512x128xf32>, vector<8x128xf32> -> vector<8x128xf32>
    %c0_3 = arith.constant 0 : index
    %c0_4 = arith.constant 0 : index
    %3 = vector.load %arg3[%c0_3, %c0_4] : memref<1x128xf32, #tpu.memory_space<vmem>>, vector<1x128xf32>
    %4 = vector.broadcast %3 : vector<1x128xf32> to vector<8x128xf32>
    %5 = arith.addf %2, %4 : vector<8x128xf32>
    %cst_5 = arith.constant 0.000000e+00 : f32
    %6 = vector.broadcast %cst_5 : f32 to vector<8x128xf32>
    %7 = arith.maximumf %5, %6 : vector<8x128xf32>
    %c0_6 = arith.constant 0 : index
    %c0_7 = arith.constant 0 : index
    %8 = vector.load %arg4[%c0_6, %c0_7] : memref<128x128xf32, #tpu.memory_space<vmem>>, vector<128x128xf32>
    %cst_8 = arith.constant dense<0.000000e+00> : vector<8x128xf32>
    %9 = tpu.matmul %7, %8, %cst_8 {dimension_numbers = #tpu.dot_dimension_numbers<[1], [0], [0], [1], [0, 0, 1, 1], [], []>} : vector<8x128xf32>, vector<128x128xf32>, vector<8x128xf32> -> vector<8x128xf32>
    %c0_9 = arith.constant 0 : index
    %c0_10 = arith.constant 0 : index
    %10 = vector.load %arg5[%c0_9, %c0_10] : memref<1x128xf32, #tpu.memory_space<vmem>>, vector<1x128xf32>
    %11 = vector.broadcast %10 : vector<1x128xf32> to vector<8x128xf32>
    %12 = arith.addf %9, %11 : vector<8x128xf32>
    %cst_11 = arith.constant 0.000000e+00 : f32
    %13 = vector.broadcast %cst_11 : f32 to vector<8x128xf32>
    %14 = arith.maximumf %12, %13 : vector<8x128xf32>
    %c0_12 = arith.constant 0 : index
    %c0_13 = arith.constant 0 : index
    %15 = vector.load %arg6[%c0_12, %c0_13] : memref<128x128xf32, #tpu.memory_space<vmem>>, vector<128x128xf32>
    %cst_14 = arith.constant dense<0.000000e+00> : vector<8x128xf32>
    %16 = tpu.matmul %14, %15, %cst_14 {dimension_numbers = #tpu.dot_dimension_numbers<[1], [0], [0], [1], [0, 0, 1, 1], [], []>} : vector<8x128xf32>, vector<128x128xf32>, vector<8x128xf32> -> vector<8x128xf32>
    %c0_15 = arith.constant 0 : index
    %c0_16 = arith.constant 0 : index
    %17 = vector.load %arg7[%c0_15, %c0_16] : memref<1x128xf32, #tpu.memory_space<vmem>>, vector<1x128xf32>
    %18 = vector.broadcast %17 : vector<1x128xf32> to vector<8x128xf32>
    %19 = arith.addf %16, %18 : vector<8x128xf32>
    %c0_17 = arith.constant 0 : index
    %c0_18 = arith.constant 0 : index
    %20 = vector.load %arg8[%c0_17, %c0_18] : memref<8x128xf32, #tpu.memory_space<vmem>>, vector<8x128xf32>
    tpu.vector_store %arg8[%c0_17, %c0_18], %19 {strides = array<i32>} : memref<8x128xf32, #tpu.memory_space<vmem>>, vector<8x128xf32>,
    return
  }
  func.func @transform_0(%arg0: i32) -> (i32, i32) {
    %c0_i32 = arith.constant 0 : i32
    %c0_i32_0 = arith.constant 0 : i32
    %c0_i32_1 = arith.constant 0 : i32
    return %c0_i32, %c0_i32_0 : i32, i32
  }
  func.func @transform_1(%arg0: i32) -> (i32, i32) {
    %c0_i32 = arith.constant 0 : i32
    %c0_i32_0 = arith.constant 0 : i32
    %c0_i32_1 = arith.constant 0 : i32
    return %c0_i32, %c0_i32_0 : i32, i32
  }
  func.func @transform_2(%arg0: i32) -> (i32, i32) {
    %c0_i32 = arith.constant 0 : i32
    %c0_i32_0 = arith.constant 0 : i32
    %c0_i32_1 = arith.constant 0 : i32
    return %c0_i32, %c0_i32_0 : i32, i32
  }
  func.func @transform_3(%arg0: i32) -> (i32, i32) {
    %c0_i32 = arith.constant 0 : i32
    %c0_i32_0 = arith.constant 0 : i32
    %c0_i32_1 = arith.constant 0 : i32
    return %c0_i32, %c0_i32_0 : i32, i32
  }
  func.func @transform_4(%arg0: i32) -> (i32, i32) {
    %c0_i32 = arith.constant 0 : i32
    %c0_i32_0 = arith.constant 0 : i32
    %c0_i32_1 = arith.constant 0 : i32
    return %c0_i32, %c0_i32_0 : i32, i32
  }
  func.func @transform_5(%arg0: i32) -> (i32, i32) {
    %c0_i32 = arith.constant 0 : i32
    %c0_i32_0 = arith.constant 0 : i32
    %c0_i32_1 = arith.constant 0 : i32
    return %c0_i32, %c0_i32_0 : i32, i32
  }
  func.func @transform_6(%arg0: i32) -> (i32, i32) {
    %c0_i32 = arith.constant 0 : i32
    %c0_i32_0 = arith.constant 0 : i32
    %c0_i32_1 = arith.constant 0 : i32
    return %c0_i32, %c0_i32_0 : i32, i32
  }
  func.func @transform_7(%arg0: i32) -> (i32, i32) {
    %c0_i32 = arith.constant 0 : i32
    %c0_i32_0 = arith.constant 0 : i32
    %c0_i32_1 = arith.constant 0 : i32
    return %c0_i32, %c0_i32_0 : i32, i32
  }
}

</mosaic_0001>

<llo_original>
// kernel: neural_net_forward.3
$region0: #{neural_net_forward.3}
  #allocation0 [shape = 'u32[]', space=smem, size = 0x4, offset = 0x4, fixed_abs, tag = 'smem constant byte address 0x4 - core index']
  #allocation1 [shape = 'u32[72,128]{1,0:T(1,128)}', space=vmem, size = 0x9000, scoped, tag = 'internal scratch']
  %s0 = inlined_call_operand.vmem [shape: f32[4,392,128], index: 0, kind: input, shape index: {}]
  %s1 = inlined_call_operand.vmem [shape: f32[128,128], index: 1, kind: input, shape index: {}]
  %s2 = inlined_call_operand.vmem [shape: f32[1,128], index: 2, kind: input, shape index: {}]
  %s3 = inlined_call_operand.vmem [shape: f32[392,128], index: 3, kind: output, shape index: {}]
  %s4 = sld [smem:[#allocation0]]
  $region22: #{neural_net_forward.3} parent=0
    _
  %s6 = ssub.s32 1, %s4
  %s7 = scalar_select 0, %s6, %s4
  // Predicated region
  $region2: #{neural_net_forward.3} parent=0 // pred_check
    _
  $region3: #{neural_net_forward.3} parent=0 // pred_check_branch
    %9 = sbr.rel (0) target = $region5
  $region4: #{neural_net_forward.3} parent=0 // pred_region
    _
  $region5: #{neural_net_forward.3} parent=0 // pred_fallthru
    _
  // Predicated region
  $region6: #{neural_net_forward.3} parent=0 // pred_check
    _
  $region7: #{neural_net_forward.3} parent=0 // pred_check_branch
    %11 = sbr.rel (0) target = $region9
  $region8: #{neural_net_forward.3} parent=0 // pred_region
    _
  $region9: #{neural_net_forward.3} parent=0 // pred_fallthru
    _
  // Predicated region
  $region10: #{neural_net_forward.3} parent=0 // pred_check
    _
  $region11: #{neural_net_forward.3} parent=0 // pred_check_branch
    %13 = sbr.rel (0) target = $region13
  $region12: #{neural_net_forward.3} parent=0 // pred_region
    _
  $region13: #{neural_net_forward.3} parent=0 // pred_fallthru
    _
  %v14 = vld [vmem:[%s1] sm:$0xff]
  %v15 = vld [vmem:[%s1 + $0x8] sm:$0xff]
  %v16 = vld [vmem:[%s1 + $0x10] sm:$0xff]
  %v17 = vld [vmem:[%s1 + $0x18] sm:$0xff]
  %v18 = vld [vmem:[%s1 + $0x20] sm:$0xff]
  %v19 = vld [vmem:[%s1 + $0x28] sm:$0xff]
  %v20 = vld [vmem:[%s1 + $0x30] sm:$0xff]
  %v21 = vld [vmem:[%s1 + $0x38] sm:$0xff]
  %v22 = vld [vmem:[%s1 + $0x40] sm:$0xff]
  %v23 = vld [vmem:[%s1 + $0x48] sm:$0xff]
  %v24 = vld [vmem:[%s1 + $0x50] sm:$0xff]
  %v25 = vld [vmem:[%s1 + $0x58] sm:$0xff]
  %v26 = vld [vmem:[%s1 + $0x60] sm:$0xff]
  %v27 = vld [vmem:[%s1 + $0x68] sm:$0xff]
  %v28 = vld [vmem:[%s1 + $0x70] sm:$0xff]
  %v29 = vld [vmem:[%s1 + $0x78] sm:$0xff]
  %v30 = vld [vmem:[%s0] sm:$0xff]
  %v31 = vld [vmem:[%s0 + $0x8] sm:$0xff]
  %v32 = vld [vmem:[%s0 + $0x10] sm:$0xff]
  %v33 = vld [vmem:[%s0 + $0x18] sm:$0xff]
  %v34 = vld [vmem:[%s0 + $0x20] sm:$0xff]
  %v35 = vld [vmem:[%s0 + $0x28] sm:$0xff]
  %v36 = vld [vmem:[%s0 + $0x30] sm:$0xff]
  %v37 = vld [vmem:[%s0 + $0x38] sm:$0xff]
  %v38 = vld [vmem:[%s0 + $0x40] sm:$0xff]
  %v39 = vld [vmem:[%s0 + $0x48] sm:$0xff]
  %v40 = vld [vmem:[%s0 + $0x50] sm:$0xff]
  %v41 = vld [vmem:[%s0 + $0x58] sm:$0xff]
  %v42 = vld [vmem:[%s0 + $0x60] sm:$0xff]
  %v43 = vld [vmem:[%s0 + $0x68] sm:$0xff]
  %v44 = vld [vmem:[%s0 + $0x70] sm:$0xff]
  %v45 = vld [vmem:[%s0 + $0x78] sm:$0xff]
  %v46 = vld [vmem:[%s0 + $0x80] sm:$0xff]
  %v47 = vld [vmem:[%s0 + $0x88] sm:$0xff]
  %v48 = vld [vmem:[%s0 + $0x90] sm:$0xff]
  %v49 = vld [vmem:[%s0 + $0x98] sm:$0xff]
  %v50 = vld [vmem:[%s0 + $0xa0] sm:$0xff]
  %v51 = vld [vmem:[%s0 + $0xa8] sm:$0xff]
  %v52 = vld [vmem:[%s0 + $0xb0] sm:$0xff]
  %v53 = vld [vmem:[%s0 + $0xb8] sm:$0xff]
  %v54 = vld [vmem:[%s0 + $0xc0] sm:$0xff]
  %v55 = vld [vmem:[%s0 + $0xc8] sm:$0xff]
  %v56 = vld [vmem:[%s0 + $0xd0] sm:$0xff]
  %v57 = vld [vmem:[%s0 + $0xd8] sm:$0xff]
  %v58 = vld [vmem:[%s0 + $0xe0] sm:$0xff]
  %v59 = vld [vmem:[%s0 + $0xe8] sm:$0xff]
  %v60 = vld [vmem:[%s0 + $0xf0] sm:$0xff]
  %v61 = vld [vmem:[%s0 + $0xf8] sm:$0xff]
  %v62 = vld [vmem:[%s0 + $0x100] sm:$0xff]
  %v63 = vld [vmem:[%s0 + $0x108] sm:$0xff]
  %v64 = vld [vmem:[%s0 + $0x110] sm:$0xff]
  %v65 = vld [vmem:[%s0 + $0x118] sm:$0xff]
  %v66 = vld [vmem:[%s0 + $0x120] sm:$0xff]
  %v67 = vld [vmem:[%s0 + $0x128] sm:$0xff]
  %v68 = vld [vmem:[%s0 + $0x130] sm:$0xff]
  %v69 = vld [vmem:[%s0 + $0x138] sm:$0xff]
  %v70 = vld [vmem:[%s0 + $0x140] sm:$0xff]
  %v71 = vld [vmem:[%s0 + $0x148] sm:$0xff]
  %v72 = vld [vmem:[%s0 + $0x150] sm:$0xff]
  %v73 = vld [vmem:[%s0 + $0x158] sm:$0xff]
  %v74 = vld [vmem:[%s0 + $0x160] sm:$0xff]
  %v75 = vld [vmem:[%s0 + $0x168] sm:$0xff]
  %v76 = vld [vmem:[%s0 + $0x170] sm:$0xff]
  %v77 = vld [vmem:[%s0 + $0x178] sm:$0xff]
  %v78 = vld [vmem:[%s0 + $0x180] sm:$0xff]
  %79 = vmatpush.msra.mxu0 %v29
  %80 = vmatpush.msra.mxu0 %v28
  %81 = vmatpush.msra.mxu0 %v27
  %82 = vmatpush.msra.mxu0 %v26
  %83 = vmatpush.msra.mxu0 %v25
  %84 = vmatpush.msra.mxu0 %v24
  %85 = vmatpush.msra.mxu0 %v23
  %86 = vmatpush.msra.mxu0 %v22
  %87 = vmatpush.msra.mxu0 %v21
  %88 = vmatpush.msra.mxu0 %v20
  %89 = vmatpush.msra.mxu0 %v19
  %90 = vmatpush.msra.mxu0 %v18
  %91 = vmatpush.msra.mxu0 %v17
  %92 = vmatpush.msra.mxu0 %v16
  %93 = vmatpush.msra.mxu0 %v15
  %94 = vmatpush.msra.mxu0 %v14
  %95 = vmatmul.f32.gmra.mxu0 %v30
  %v96 = vpop.f32.mrf.mxu0
  %v97 = vadd.f32 0.0, %v96
  %98 = vmatmul.f32.gmra.mxu0 %v31
  %v99 = vpop.f32.mrf.mxu0
  %v100 = vadd.f32 0.0, %v99
  %101 = vmatmul.f32.gmra.mxu0 %v32
  %v102 = vpop.f32.mrf.mxu0
  %v103 = vadd.f32 0.0, %v102
  %104 = vmatmul.f32.gmra.mxu0 %v33
  %v105 = vpop.f32.mrf.mxu0
  %v106 = vadd.f32 0.0, %v105
  %107 = vmatmul.f32.gmra.mxu0 %v34
  %v108 = vpop.f32.mrf.mxu0
  %v109 = vadd.f32 0.0, %v108
  %110 = vmatmul.f32.gmra.mxu0 %v35
  %v111 = vpop.f32.mrf.mxu0
  %v112 = vadd.f32 0.0, %v111
  %113 = vmatmul.f32.gmra.mxu0 %v36
  %v114 = vpop.f32.mrf.mxu0
  %v115 = vadd.f32 0.0, %v114
  %116 = vmatmul.f32.gmra.mxu0 %v37
  %v117 = vpop.f32.mrf.mxu0
  %v118 = vadd.f32 0.0, %v117
  %119 = vmatmul.f32.gmra.mxu0 %v38
  %v120 = vpop.f32.mrf.mxu0
  %v121 = vadd.f32 0.0, %v120
  %122 = vmatmul.f32.gmra.mxu0 %v39
  %v123 = vpop.f32.mrf.mxu0
  %v124 = vadd.f32 0.0, %v123
  %125 = vmatmul.f32.gmra.mxu0 %v40
  %v126 = vpop.f32.mrf.mxu0
  %v127 = vadd.f32 0.0, %v126
  %128 = vmatmul.f32.gmra.mxu0 %v41
  %v129 = vpop.f32.mrf.mxu0
  %v130 = vadd.f32 0.0, %v129
  %131 = vmatmul.f32.gmra.mxu0 %v42
  %v132 = vpop.f32.mrf.mxu0
  %v133 = vadd.f32 0.0, %v132
  %134 = vmatmul.f32.gmra.mxu0 %v43
  %v135 = vpop.f32.mrf.mxu0
  %v136 = vadd.f32 0.0, %v135
  %137 = vmatmul.f32.gmra.mxu0 %v44
  %v138 = vpop.f32.mrf.mxu0
  %v139 = vadd.f32 0.0, %v138
  %140 = vmatmul.f32.gmra.mxu0 %v45
  %v141 = vpop.f32.mrf.mxu0
  %v142 = vadd.f32 0.0, %v141
  %143 = vmatmul.f32.gmra.mxu0 %v46
  %v144 = vpop.f32.mrf.mxu0
  %v145 = vadd.f32 0.0, %v144
  %146 = vmatmul.f32.gmra.mxu0 %v47
  %v147 = vpop.f32.mrf.mxu0
  %v148 = vadd.f32 0.0, %v147
  %149 = vmatmul.f32.gmra.mxu0 %v48
  %v150 = vpop.f32.mrf.mxu0
  %v151 = vadd.f32 0.0, %v150
  %152 = vmatmul.f32.gmra.mxu0 %v49
  %v153 = vpop.f32.mrf.mxu0
  %v154 = vadd.f32 0.0, %v153
  %155 = vmatmul.f32.gmra.mxu0 %v50
  %v156 = vpop.f32.mrf.mxu0
  %v157 = vadd.f32 0.0, %v156
  %158 = vmatmul.f32.gmra.mxu0 %v51
  %v159 = vpop.f32.mrf.mxu0
  %v160 = vadd.f32 0.0, %v159
  %161 = vmatmul.f32.gmra.mxu0 %v52
  %v162 = vpop.f32.mrf.mxu0
  %v163 = vadd.f32 0.0, %v162
  %164 = vmatmul.f32.gmra.mxu0 %v53
  %v165 = vpop.f32.mrf.mxu0
  %v166 = vadd.f32 0.0, %v165
  %167 = vmatmul.f32.gmra.mxu0 %v54
  %v168 = vpop.f32.mrf.mxu0
  %v169 = vadd.f32 0.0, %v168
  %170 = vmatmul.f32.gmra.mxu0 %v55
  %v171 = vpop.f32.mrf.mxu0
  %v172 = vadd.f32 0.0, %v171
  %173 = vmatmul.f32.gmra.mxu0 %v56
  %v174 = vpop.f32.mrf.mxu0
  %v175 = vadd.f32 0.0, %v174
  %176 = vmatmul.f32.gmra.mxu0 %v57
  %v177 = vpop.f32.mrf.mxu0
  %v178 = vadd.f32 0.0, %v177
  %179 = vmatmul.f32.gmra.mxu0 %v58
  %v180 = vpop.f32.mrf.mxu0
  %v181 = vadd.f32 0.0, %v180
  %182 = vmatmul.f32.gmra.mxu0 %v59
  %v183 = vpop.f32.mrf.mxu0
  %v184 = vadd.f32 0.0, %v183
  %185 = vmatmul.f32.gmra.mxu0 %v60
  %v186 = vpop.f32.mrf.mxu0
  %v187 = vadd.f32 0.0, %v186
  %188 = vmatmul.f32.gmra.mxu0 %v61
  %v189 = vpop.f32.mrf.mxu0
  %v190 = vadd.f32 0.0, %v189
  %191 = vmatmul.f32.gmra.mxu0 %v62
  %v192 = vpop.f32.mrf.mxu0
  %v193 = vadd.f32 0.0, %v192
  %194 = vmatmul.f32.gmra.mxu0 %v63
  %v195 = vpop.f32.mrf.mxu0
  %v196 = vadd.f32 0.0, %v195
  %197 = vmatmul.f32.gmra.mxu0 %v64
  %v198 = vpop.f32.mrf.mxu0
  %v199 = vadd.f32 0.0, %v198
  %200 = vmatmul.f32.gmra.mxu0 %v65
  %v201 = vpop.f32.mrf.mxu0
  %v202 = vadd.f32 0.0, %v201
  %203 = vmatmul.f32.gmra.mxu0 %v66
  %v204 = vpop.f32.mrf.mxu0
  %v205 = vadd.f32 0.0, %v204
  %206 = vmatmul.f32.gmra.mxu0 %v67
  %v207 = vpop.f32.mrf.mxu0
  %v208 = vadd.f32 0.0, %v207
  %209 = vmatmul.f32.gmra.mxu0 %v68
  %v210 = vpop.f32.mrf.mxu0
  %v211 = vadd.f32 0.0, %v210
  %212 = vmatmul.f32.gmra.mxu0 %v69
  %v213 = vpop.f32.mrf.mxu0
  %v214 = vadd.f32 0.0, %v213
  %215 = vmatmul.f32.gmra.mxu0 %v70
  %v216 = vpop.f32.mrf.mxu0
  %v217 = vadd.f32 0.0, %v216
  %218 = vmatmul.f32.gmra.mxu0 %v71
  %v219 = vpop.f32.mrf.mxu0
  %v220 = vadd.f32 0.0, %v219
  %221 = vmatmul.f32.gmra.mxu0 %v72
  %v222 = vpop.f32.mrf.mxu0
  %v223 = vadd.f32 0.0, %v222
  %224 = vmatmul.f32.gmra.mxu0 %v73
  %v225 = vpop.f32.mrf.mxu0
  %v226 = vadd.f32 0.0, %v225
  %227 = vmatmul.f32.gmra.mxu0 %v74
  %v228 = vpop.f32.mrf.mxu0
  %v229 = vadd.f32 0.0, %v228
  %230 = vmatmul.f32.gmra.mxu0 %v75
  %v231 = vpop.f32.mrf.mxu0
  %v232 = vadd.f32 0.0, %v231
  %233 = vmatmul.f32.gmra.mxu0 %v76
  %v234 = vpop.f32.mrf.mxu0
  %v235 = vadd.f32 0.0, %v234
  %236 = vmatmul.f32.gmra.mxu0 %v77
  %v237 = vpop.f32.mrf.mxu0
  %v238 = vadd.f32 0.0, %v237
  %239 = vmatmul.f32.gmra.mxu0 %v78
  %v240 = vpop.f32.mrf.mxu0
  %v241 = vadd.f32 0.0, %v240
  %242 = vdwg.mxu0
  %s243 = scalar_lea.vmem %s0, 392
  %v244 = vld [vmem:[%s243] sm:$0xff]
  %v245 = vld [vmem:[%s243 + $0x8] sm:$0xff]
  %v246 = vld [vmem:[%s243 + $0x10] sm:$0xff]
  %v247 = vld [vmem:[%s243 + $0x18] sm:$0xff]
  %v248 = vld [vmem:[%s243 + $0x20] sm:$0xff]
  %v249 = vld [vmem:[%s243 + $0x28] sm:$0xff]
  %v250 = vld [vmem:[%s243 + $0x30] sm:$0xff]
  %v251 = vld [vmem:[%s243 + $0x38] sm:$0xff]
  %v252 = vld [vmem:[%s243 + $0x40] sm:$0xff]
  %v253 = vld [vmem:[%s243 + $0x48] sm:$0xff]
  %v254 = vld [vmem:[%s243 + $0x50] sm:$0xff]
  %v255 = vld [vmem:[%s243 + $0x58] sm:$0xff]
  %v256 = vld [vmem:[%s243 + $0x60] sm:$0xff]
  %v257 = vld [vmem:[%s243 + $0x68] sm:$0xff]
  %v258 = vld [vmem:[%s243 + $0x70] sm:$0xff]
  %v259 = vld [vmem:[%s243 + $0x78] sm:$0xff]
  %v260 = vld [vmem:[%s243 + $0x80] sm:$0xff]
  %v261 = vld [vmem:[%s243 + $0x88] sm:$0xff]
  %v262 = vld [vmem:[%s243 + $0x90] sm:$0xff]
  %v263 = vld [vmem:[%s243 + $0x98] sm:$0xff]
  %v264 = vld [vmem:[%s243 + $0xa0] sm:$0xff]
  %v265 = vld [vmem:[%s243 + $0xa8] sm:$0xff]
  %v266 = vld [vmem:[%s243 + $0xb0] sm:$0xff]
  %v267 = vld [vmem:[%s243 + $0xb8] sm:$0xff]
  %v268 = vld [vmem:[%s243 + $0xc0] sm:$0xff]
  %v269 = vld [vmem:[%s243 + $0xc8] sm:$0xff]
  %v270 = vld [vmem:[%s243 + $0xd0] sm:$0xff]
  %v271 = vld [vmem:[%s243 + $0xd8] sm:$0xff]
  %v272 = vld [vmem:[%s243 + $0xe0] sm:$0xff]
  %v273 = vld [vmem:[%s243 + $0xe8] sm:$0xff]
  %v274 = vld [vmem:[%s243 + $0xf0] sm:$0xff]
  %v275 = vld [vmem:[%s243 + $0xf8] sm:$0xff]
  %v276 = vld [vmem:[%s243 + $0x100] sm:$0xff]
  %v277 = vld [vmem:[%s243 + $0x108] sm:$0xff]
  %v278 = vld [vmem:[%s243 + $0x110] sm:$0xff]
  %v279 = vld [vmem:[%s243 + $0x118] sm:$0xff]
  %v280 = vld [vmem:[%s243 + $0x120] sm:$0xff]
  %v281 = vld [vmem:[%s243 + $0x128] sm:$0xff]
  %v282 = vld [vmem:[%s243 + $0x130] sm:$0xff]
  %v283 = vld [vmem:[%s243 + $0x138] sm:$0xff]
  %v284 = vld [vmem:[%s243 + $0x140] sm:$0xff]
  %v285 = vld [vmem:[%s243 + $0x148] sm:$0xff]
  %v286 = vld [vmem:[%s243 + $0x150] sm:$0xff]
  %v287 = vld [vmem:[%s243 + $0x158] sm:$0xff]
  %v288 = vld [vmem:[%s243 + $0x160] sm:$0xff]
  %v289 = vld [vmem:[%s243 + $0x168] sm:$0xff]
  %v290 = vld [vmem:[%s243 + $0x170] sm:$0xff]
  %v291 = vld [vmem:[%s243 + $0x178] sm:$0xff]
  %v292 = vld [vmem:[%s243 + $0x180] sm:$0xff]
  %293 = vmatpush.msra.mxu0 %v29
  %294 = vmatpush.msra.mxu0 %v28
  %295 = vmatpush.msra.mxu0 %v27
  %296 = vmatpush.msra.mxu0 %v26
  %297 = vmatpush.msra.mxu0 %v25
  %298 = vmatpush.msra.mxu0 %v24
  %299 = vmatpush.msra.mxu0 %v23
  %300 = vmatpush.msra.mxu0 %v22
  %301 = vmatpush.msra.mxu0 %v21
  %302 = vmatpush.msra.mxu0 %v20
  %303 = vmatpush.msra.mxu0 %v19
  %304 = vmatpush.msra.mxu0 %v18
  %305 = vmatpush.msra.mxu0 %v17
  %306 = vmatpush.msra.mxu0 %v16
  %307 = vmatpush.msra.mxu0 %v15
  %308 = vmatpush.msra.mxu0 %v14
  %309 = vmatmul.f32.gmra.mxu0 %v244
  %v310 = vpop.f32.mrf.mxu0
  %v311 = vadd.f32 0.0, %v310
  %312 = vmatmul.f32.gmra.mxu0 %v245
  %v313 = vpop.f32.mrf.mxu0
  %v314 = vadd.f32 0.0, %v313
  %315 = vmatmul.f32.gmra.mxu0 %v246
  %v316 = vpop.f32.mrf.mxu0
  %v317 = vadd.f32 0.0, %v316
  %318 = vmatmul.f32.gmra.mxu0 %v247
  %v319 = vpop.f32.mrf.mxu0
  %v320 = vadd.f32 0.0, %v319
  %321 = vmatmul.f32.gmra.mxu0 %v248
  %v322 = vpop.f32.mrf.mxu0
  %v323 = vadd.f32 0.0, %v322
  %324 = vmatmul.f32.gmra.mxu0 %v249
  %v325 = vpop.f32.mrf.mxu0
  %v326 = vadd.f32 0.0, %v325
  %327 = vmatmul.f32.gmra.mxu0 %v250
  %v328 = vpop.f32.mrf.mxu0
  %v329 = vadd.f32 0.0, %v328
  %330 = vmatmul.f32.gmra.mxu0 %v251
  %v331 = vpop.f32.mrf.mxu0
  %v332 = vadd.f32 0.0, %v331
  %333 = vmatmul.f32.gmra.mxu0 %v252
  %v334 = vpop.f32.mrf.mxu0
  %v335 = vadd.f32 0.0, %v334
  %336 = vmatmul.f32.gmra.mxu0 %v253
  %v337 = vpop.f32.mrf.mxu0
  %v338 = vadd.f32 0.0, %v337
  %339 = vmatmul.f32.gmra.mxu0 %v254
  %v340 = vpop.f32.mrf.mxu0
  %v341 = vadd.f32 0.0, %v340
  %342 = vmatmul.f32.gmra.mxu0 %v255
  %v343 = vpop.f32.mrf.mxu0
  %v344 = vadd.f32 0.0, %v343
  %345 = vmatmul.f32.gmra.mxu0 %v256
  %v346 = vpop.f32.mrf.mxu0
  %v347 = vadd.f32 0.0, %v346
  %348 = vmatmul.f32.gmra.mxu0 %v257
  %v349 = vpop.f32.mrf.mxu0
  %v350 = vadd.f32 0.0, %v349
  %351 = vmatmul.f32.gmra.mxu0 %v258
  %v352 = vpop.f32.mrf.mxu0
  %v353 = vadd.f32 0.0, %v352
  %354 = vmatmul.f32.gmra.mxu0 %v259
  %v355 = vpop.f32.mrf.mxu0
  %v356 = vadd.f32 0.0, %v355
  %357 = vmatmul.f32.gmra.mxu0 %v260
  %v358 = vpop.f32.mrf.mxu0
  %v359 = vadd.f32 0.0, %v358
  %360 = vmatmul.f32.gmra.mxu0 %v261
  %v361 = vpop.f32.mrf.mxu0
  %v362 = vadd.f32 0.0, %v361
  %363 = vmatmul.f32.gmra.mxu0 %v262
  %v364 = vpop.f32.mrf.mxu0
  %v365 = vadd.f32 0.0, %v364
  %366 = vmatmul.f32.gmra.mxu0 %v263
  %v367 = vpop.f32.mrf.mxu0
  %v368 = vadd.f32 0.0, %v367
  %369 = vmatmul.f32.gmra.mxu0 %v264
  %v370 = vpop.f32.mrf.mxu0
  %v371 = vadd.f32 0.0, %v370
  %372 = vmatmul.f32.gmra.mxu0 %v265
  %v373 = vpop.f32.mrf.mxu0
  %v374 = vadd.f32 0.0, %v373
  %375 = vmatmul.f32.gmra.mxu0 %v266
  %v376 = vpop.f32.mrf.mxu0
  %v377 = vadd.f32 0.0, %v376
  %378 = vmatmul.f32.gmra.mxu0 %v267
  %v379 = vpop.f32.mrf.mxu0
  %v380 = vadd.f32 0.0, %v379
  %381 = vmatmul.f32.gmra.mxu0 %v268
  %v382 = vpop.f32.mrf.mxu0
  %v383 = vadd.f32 0.0, %v382
  %384 = vmatmul.f32.gmra.mxu0 %v269
  %v385 = vpop.f32.mrf.mxu0
  %v386 = vadd.f32 0.0, %v385
  %387 = vmatmul.f32.gmra.mxu0 %v270
  %v388 = vpop.f32.mrf.mxu0
  %v389 = vadd.f32 0.0, %v388
  %390 = vmatmul.f32.gmra.mxu0 %v271
  %v391 = vpop.f32.mrf.mxu0
  %v392 = vadd.f32 0.0, %v391
  %393 = vmatmul.f32.gmra.mxu0 %v272
  %v394 = vpop.f32.mrf.mxu0
  %v395 = vadd.f32 0.0, %v394
  %396 = vmatmul.f32.gmra.mxu0 %v273
  %v397 = vpop.f32.mrf.mxu0
  %v398 = vadd.f32 0.0, %v397
  %399 = vmatmul.f32.gmra.mxu0 %v274
  %v400 = vpop.f32.mrf.mxu0
  %v401 = vadd.f32 0.0, %v400
  %402 = vmatmul.f32.gmra.mxu0 %v275
  %v403 = vpop.f32.mrf.mxu0
  %v404 = vadd.f32 0.0, %v403
  %405 = vmatmul.f32.gmra.mxu0 %v276
  %v406 = vpop.f32.mrf.mxu0
  %v407 = vadd.f32 0.0, %v406
  %408 = vmatmul.f32.gmra.mxu0 %v277
  %v409 = vpop.f32.mrf.mxu0
  %v410 = vadd.f32 0.0, %v409
  %411 = vmatmul.f32.gmra.mxu0 %v278
  %v412 = vpop.f32.mrf.mxu0
  %v413 = vadd.f32 0.0, %v412
  %414 = vmatmul.f32.gmra.mxu0 %v279
  %v415 = vpop.f32.mrf.mxu0
  %v416 = vadd.f32 0.0, %v415
  %417 = vmatmul.f32.gmra.mxu0 %v280
  %v418 = vpop.f32.mrf.mxu0
  %v419 = vadd.f32 0.0, %v418
  %420 = vmatmul.f32.gmra.mxu0 %v281
  %v421 = vpop.f32.mrf.mxu0
  %v422 = vadd.f32 0.0, %v421
  %423 = vmatmul.f32.gmra.mxu0 %v282
  %v424 = vpop.f32.mrf.mxu0
  %v425 = vadd.f32 0.0, %v424
  %426 = vmatmul.f32.gmra.mxu0 %v283
  %v427 = vpop.f32.mrf.mxu0
  %v428 = vadd.f32 0.0, %v427
  %429 = vmatmul.f32.gmra.mxu0 %v284
  %v430 = vpop.f32.mrf.mxu0
  %v431 = vadd.f32 0.0, %v430
  %432 = vmatmul.f32.gmra.mxu0 %v285
  %v433 = vpop.f32.mrf.mxu0
  %v434 = vadd.f32 0.0, %v433
  %435 = vmatmul.f32.gmra.mxu0 %v286
  %v436 = vpop.f32.mrf.mxu0
  %v437 = vadd.f32 0.0, %v436
  %438 = vmatmul.f32.gmra.mxu0 %v287
  %v439 = vpop.f32.mrf.mxu0
  %v440 = vadd.f32 0.0, %v439
  %441 = vmatmul.f32.gmra.mxu0 %v288
  %v442 = vpop.f32.mrf.mxu0
  %v443 = vadd.f32 0.0, %v442
  %444 = vmatmul.f32.gmra.mxu0 %v289
  %v445 = vpop.f32.mrf.mxu0
  %v446 = vadd.f32 0.0, %v445
  %447 = vmatmul.f32.gmra.mxu0 %v290
  %v448 = vpop.f32.mrf.mxu0
  %v449 = vadd.f32 0.0, %v448
  %450 = vmatmul.f32.gmra.mxu0 %v291
  %v451 = vpop.f32.mrf.mxu0
  %v452 = vadd.f32 0.0, %v451
  %453 = vmatmul.f32.gmra.mxu0 %v292
  %v454 = vpop.f32.mrf.mxu0
  %v455 = vadd.f32 0.0, %v454
  %456 = vdwg.mxu0
  %v457 = vmax.f32 %v97, %v311
  %v458 = vmax.f32 %v100, %v314
  %v459 = vmax.f32 %v103, %v317
  %v460 = vmax.f32 %v106, %v320
  %v461 = vmax.f32 %v109, %v323
  %v462 = vmax.f32 %v112, %v326
  %v463 = vmax.f32 %v115, %v329
  %v464 = vmax.f32 %v118, %v332
  %v465 = vmax.f32 %v121, %v335
  %v466 = vmax.f32 %v124, %v338
  %v467 = vmax.f32 %v127, %v341
  %v468 = vmax.f32 %v130, %v344
  %v469 = vmax.f32 %v133, %v347
  %v470 = vmax.f32 %v136, %v350
  %v471 = vmax.f32 %v139, %v353
  %v472 = vmax.f32 %v142, %v356
  %v473 = vmax.f32 %v145, %v359
  %v474 = vmax.f32 %v148, %v362
  %v475 = vmax.f32 %v151, %v365
  %v476 = vmax.f32 %v154, %v368
  %v477 = vmax.f32 %v157, %v371
  %v478 = vmax.f32 %v160, %v374
  %v479 = vmax.f32 %v163, %v377
  %v480 = vmax.f32 %v166, %v380
  %v481 = vmax.f32 %v169, %v383
  %v482 = vmax.f32 %v172, %v386
  %v483 = vmax.f32 %v175, %v389
  %v484 = vmax.f32 %v178, %v392
  %v485 = vmax.f32 %v181, %v395
  %v486 = vmax.f32 %v184, %v398
  %v487 = vmax.f32 %v187, %v401
  %v488 = vmax.f32 %v190, %v404
  %v489 = vmax.f32 %v193, %v407
  %v490 = vmax.f32 %v196, %v410
  %v491 = vmax.f32 %v199, %v413
  %v492 = vmax.f32 %v202, %v416
  %v493 = vmax.f32 %v205, %v419
  %v494 = vmax.f32 %v208, %v422
  %v495 = vmax.f32 %v211, %v425
  %v496 = vmax.f32 %v214, %v428
  %v497 = vmax.f32 %v217, %v431
  %v498 = vmax.f32 %v220, %v434
  %v499 = vmax.f32 %v223, %v437
  %v500 = vmax.f32 %v226, %v440
  %v501 = vmax.f32 %v229, %v443
  %v502 = vmax.f32 %v232, %v446
  %v503 = vmax.f32 %v235, %v449
  %v504 = vmax.f32 %v238, %v452
  %v505 = vmax.f32 %v241, %v455
  %s506 = scalar_lea.vmem %s0, 784
  %v507 = vld [vmem:[%s506] sm:$0xff]
  %v508 = vld [vmem:[%s506 + $0x8] sm:$0xff]
  %v509 = vld [vmem:[%s506 + $0x10] sm:$0xff]
  %v510 = vld [vmem:[%s506 + $0x18] sm:$0xff]
  %v511 = vld [vmem:[%s506 + $0x20] sm:$0xff]
  %v512 = vld [vmem:[%s506 + $0x28] sm:$0xff]
  %v513 = vld [vmem:[%s506 + $0x30] sm:$0xff]
  %v514 = vld [vmem:[%s506 + $0x38] sm:$0xff]
  %v515 = vld [vmem:[%s506 + $0x40] sm:$0xff]
  %v516 = vld [vmem:[%s506 + $0x48] sm:$0xff]
  %v517 = vld [vmem:[%s506 + $0x50] sm:$0xff]
  %v518 = vld [vmem:[%s506 + $0x58] sm:$0xff]
  %v519 = vld [vmem:[%s506 + $0x60] sm:$0xff]
  %v520 = vld [vmem:[%s506 + $0x68] sm:$0xff]
  %v521 = vld [vmem:[%s506 + $0x70] sm:$0xff]
  %v522 = vld [vmem:[%s506 + $0x78] sm:$0xff]
  %v523 = vld [vmem:[%s506 + $0x80] sm:$0xff]
  %v524 = vld [vmem:[%s506 + $0x88] sm:$0xff]
  %v525 = vld [vmem:[%s506 + $0x90] sm:$0xff]
  %v526 = vld [vmem:[%s506 + $0x98] sm:$0xff]
  %v527 = vld [vmem:[%s506 + $0xa0] sm:$0xff]
  %v528 = vld [vmem:[%s506 + $0xa8] sm:$0xff]
  %v529 = vld [vmem:[%s506 + $0xb0] sm:$0xff]
  %v530 = vld [vmem:[%s506 + $0xb8] sm:$0xff]
  %v531 = vld [vmem:[%s506 + $0xc0] sm:$0xff]
  %v532 = vld [vmem:[%s506 + $0xc8] sm:$0xff]
  %v533 = vld [vmem:[%s506 + $0xd0] sm:$0xff]
  %v534 = vld [vmem:[%s506 + $0xd8] sm:$0xff]
  %v535 = vld [vmem:[%s506 + $0xe0] sm:$0xff]
  %v536 = vld [vmem:[%s506 + $0xe8] sm:$0xff]
  %v537 = vld [vmem:[%s506 + $0xf0] sm:$0xff]
  %v538 = vld [vmem:[%s506 + $0xf8] sm:$0xff]
  %v539 = vld [vmem:[%s506 + $0x100] sm:$0xff]
  %v540 = vld [vmem:[%s506 + $0x108] sm:$0xff]
  %v541 = vld [vmem:[%s506 + $0x110] sm:$0xff]
  %v542 = vld [vmem:[%s506 + $0x118] sm:$0xff]
  %v543 = vld [vmem:[%s506 + $0x120] sm:$0xff]
  %v544 = vld [vmem:[%s506 + $0x128] sm:$0xff]
  %v545 = vld [vmem:[%s506 + $0x130] sm:$0xff]
  %v546 = vld [vmem:[%s506 + $0x138] sm:$0xff]
  %v547 = vld [vmem:[%s506 + $0x140] sm:$0xff]
  %v548 = vld [vmem:[%s506 + $0x148] sm:$0xff]
  %v549 = vld [vmem:[%s506 + $0x150] sm:$0xff]
  %v550 = vld [vmem:[%s506 + $0x158] sm:$0xff]
  %v551 = vld [vmem:[%s506 + $0x160] sm:$0xff]
  %v552 = vld [vmem:[%s506 + $0x168] sm:$0xff]
  %v553 = vld [vmem:[%s506 + $0x170] sm:$0xff]
  %v554 = vld [vmem:[%s506 + $0x178] sm:$0xff]
  %v555 = vld [vmem:[%s506 + $0x180] sm:$0xff]
  %556 = vmatpush.msra.mxu0 %v29
  %557 = vmatpush.msra.mxu0 %v28
  %558 = vmatpush.msra.mxu0 %v27
  %559 = vmatpush.msra.mxu0 %v26
  %560 = vmatpush.msra.mxu0 %v25
  %561 = vmatpush.msra.mxu0 %v24
  %562 = vmatpush.msra.mxu0 %v23
  %563 = vmatpush.msra.mxu0 %v22
  %564 = vmatpush.msra.mxu0 %v21
  %565 = vmatpush.msra.mxu0 %v20
  %566 = vmatpush.msra.mxu0 %v19
  %567 = vmatpush.msra.mxu0 %v18
  %568 = vmatpush.msra.mxu0 %v17
  %569 = vmatpush.msra.mxu0 %v16
  %570 = vmatpush.msra.mxu0 %v15
  %571 = vmatpush.msra.mxu0 %v14
  %572 = vmatmul.f32.gmra.mxu0 %v507
  %v573 = vpop.f32.mrf.mxu0
  %v574 = vadd.f32 0.0, %v573
  %575 = vmatmul.f32.gmra.mxu0 %v508
  %v576 = vpop.f32.mrf.mxu0
  %v577 = vadd.f32 0.0, %v576
  %578 = vmatmul.f32.gmra.mxu0 %v509
  %v579 = vpop.f32.mrf.mxu0
  %v580 = vadd.f32 0.0, %v579
  %581 = vmatmul.f32.gmra.mxu0 %v510
  %v582 = vpop.f32.mrf.mxu0
  %v583 = vadd.f32 0.0, %v582
  %584 = vmatmul.f32.gmra.mxu0 %v511
  %v585 = vpop.f32.mrf.mxu0
  %v586 = vadd.f32 0.0, %v585
  %587 = vmatmul.f32.gmra.mxu0 %v512
  %v588 = vpop.f32.mrf.mxu0
  %v589 = vadd.f32 0.0, %v588
  %590 = vmatmul.f32.gmra.mxu0 %v513
  %v591 = vpop.f32.mrf.mxu0
  %v592 = vadd.f32 0.0, %v591
  %593 = vmatmul.f32.gmra.mxu0 %v514
  %v594 = vpop.f32.mrf.mxu0
  %v595 = vadd.f32 0.0, %v594
  %596 = vmatmul.f32.gmra.mxu0 %v515
  %v597 = vpop.f32.mrf.mxu0
  %v598 = vadd.f32 0.0, %v597
  %599 = vmatmul.f32.gmra.mxu0 %v516
  %v600 = vpop.f32.mrf.mxu0
  %v601 = vadd.f32 0.0, %v600
  %602 = vmatmul.f32.gmra.mxu0 %v517
  %v603 = vpop.f32.mrf.mxu0
  %v604 = vadd.f32 0.0, %v603
  %605 = vmatmul.f32.gmra.mxu0 %v518
  %v606 = vpop.f32.mrf.mxu0
  %v607 = vadd.f32 0.0, %v606
  %608 = vmatmul.f32.gmra.mxu0 %v519
  %v609 = vpop.f32.mrf.mxu0
  %v610 = vadd.f32 0.0, %v609
  %611 = vmatmul.f32.gmra.mxu0 %v520
  %v612 = vpop.f32.mrf.mxu0
  %v613 = vadd.f32 0.0, %v612
  %614 = vmatmul.f32.gmra.mxu0 %v521
  %v615 = vpop.f32.mrf.mxu0
  %v616 = vadd.f32 0.0, %v615
  %617 = vmatmul.f32.gmra.mxu0 %v522
  %v618 = vpop.f32.mrf.mxu0
  %v619 = vadd.f32 0.0, %v618
  %620 = vmatmul.f32.gmra.mxu0 %v523
  %v621 = vpop.f32.mrf.mxu0
  %v622 = vadd.f32 0.0, %v621
  %623 = vmatmul.f32.gmra.mxu0 %v524
  %v624 = vpop.f32.mrf.mxu0
  %v625 = vadd.f32 0.0, %v624
  %626 = vmatmul.f32.gmra.mxu0 %v525
  %v627 = vpop.f32.mrf.mxu0
  %v628 = vadd.f32 0.0, %v627
  %629 = vmatmul.f32.gmra.mxu0 %v526
  %v630 = vpop.f32.mrf.mxu0
  %v631 = vadd.f32 0.0, %v630
  %632 = vmatmul.f32.gmra.mxu0 %v527
  %v633 = vpop.f32.mrf.mxu0
  %v634 = vadd.f32 0.0, %v633
  %635 = vmatmul.f32.gmra.mxu0 %v528
  %v636 = vpop.f32.mrf.mxu0
  %v637 = vadd.f32 0.0, %v636
  %638 = vmatmul.f32.gmra.mxu0 %v529
  %v639 = vpop.f32.mrf.mxu0
  %v640 = vadd.f32 0.0, %v639
  %641 = vmatmul.f32.gmra.mxu0 %v530
  %v642 = vpop.f32.mrf.mxu0
  %v643 = vadd.f32 0.0, %v642
  %644 = vmatmul.f32.gmra.mxu0 %v531
  %v645 = vpop.f32.mrf.mxu0
  %v646 = vadd.f32 0.0, %v645
  %647 = vmatmul.f32.gmra.mxu0 %v532
  %v648 = vpop.f32.mrf.mxu0
  %v649 = vadd.f32 0.0, %v648
  %650 = vmatmul.f32.gmra.mxu0 %v533
  %v651 = vpop.f32.mrf.mxu0
  %v652 = vadd.f32 0.0, %v651
  %653 = vmatmul.f32.gmra.mxu0 %v534
  %v654 = vpop.f32.mrf.mxu0
  %v655 = vadd.f32 0.0, %v654
  %656 = vmatmul.f32.gmra.mxu0 %v535
  %v657 = vpop.f32.mrf.mxu0
  %v658 = vadd.f32 0.0, %v657
  %659 = vmatmul.f32.gmra.mxu0 %v536
  %v660 = vpop.f32.mrf.mxu0
  %v661 = vadd.f32 0.0, %v660
  %662 = vmatmul.f32.gmra.mxu0 %v537
  %v663 = vpop.f32.mrf.mxu0
  %v664 = vadd.f32 0.0, %v663
  %665 = vmatmul.f32.gmra.mxu0 %v538
  %v666 = vpop.f32.mrf.mxu0
  %v667 = vadd.f32 0.0, %v666
  %668 = vmatmul.f32.gmra.mxu0 %v539
  %v669 = vpop.f32.mrf.mxu0
  %v670 = vadd.f32 0.0, %v669
  %671 = vmatmul.f32.gmra.mxu0 %v540
  %v672 = vpop.f32.mrf.mxu0
  %v673 = vadd.f32 0.0, %v672
  %674 = vmatmul.f32.gmra.mxu0 %v541
  %v675 = vpop.f32.mrf.mxu0
  %v676 = vadd.f32 0.0, %v675
  %677 = vmatmul.f32.gmra.mxu0 %v542
  %v678 = vpop.f32.mrf.mxu0
  %v679 = vadd.f32 0.0, %v678
  %680 = vmatmul.f32.gmra.mxu0 %v543
  %v681 = vpop.f32.mrf.mxu0
  %v682 = vadd.f32 0.0, %v681
  %683 = vmatmul.f32.gmra.mxu0 %v544
  %v684 = vpop.f32.mrf.mxu0
  %v685 = vadd.f32 0.0, %v684
  %686 = vmatmul.f32.gmra.mxu0 %v545
  %v687 = vpop.f32.mrf.mxu0
  %v688 = vadd.f32 0.0, %v687
  %689 = vmatmul.f32.gmra.mxu0 %v546
  %v690 = vpop.f32.mrf.mxu0
  %v691 = vadd.f32 0.0, %v690
  %692 = vmatmul.f32.gmra.mxu0 %v547
  %v693 = vpop.f32.mrf.mxu0
  %v694 = vadd.f32 0.0, %v693
  %695 = vmatmul.f32.gmra.mxu0 %v548
  %v696 = vpop.f32.mrf.mxu0
  %v697 = vadd.f32 0.0, %v696
  %698 = vmatmul.f32.gmra.mxu0 %v549
  %v699 = vpop.f32.mrf.mxu0
  %v700 = vadd.f32 0.0, %v699
  %701 = vmatmul.f32.gmra.mxu0 %v550
  %v702 = vpop.f32.mrf.mxu0
  %v703 = vadd.f32 0.0, %v702
  %704 = vmatmul.f32.gmra.mxu0 %v551
  %v705 = vpop.f32.mrf.mxu0
  %v706 = vadd.f32 0.0, %v705
  %707 = vmatmul.f32.gmra.mxu0 %v552
  %v708 = vpop.f32.mrf.mxu0
  %v709 = vadd.f32 0.0, %v708
  %710 = vmatmul.f32.gmra.mxu0 %v553
  %v711 = vpop.f32.mrf.mxu0
  %v712 = vadd.f32 0.0, %v711
  %713 = vmatmul.f32.gmra.mxu0 %v554
  %v714 = vpop.f32.mrf.mxu0
  %v715 = vadd.f32 0.0, %v714
  %716 = vmatmul.f32.gmra.mxu0 %v555
  %v717 = vpop.f32.mrf.mxu0
  %v718 = vadd.f32 0.0, %v717
  %719 = vdwg.mxu0
  %v720 = vmax.f32 %v457, %v574
  %v721 = vmax.f32 %v458, %v577
  %v722 = vmax.f32 %v459, %v580
  %v723 = vmax.f32 %v460, %v583
  %v724 = vmax.f32 %v461, %v586
  %v725 = vmax.f32 %v462, %v589
  %v726 = vmax.f32 %v463, %v592
  %v727 = vmax.f32 %v464, %v595
  %v728 = vmax.f32 %v465, %v598
  %v729 = vmax.f32 %v466, %v601
  %v730 = vmax.f32 %v467, %v604
  %v731 = vmax.f32 %v468, %v607
  %v732 = vmax.f32 %v469, %v610
  %v733 = vmax.f32 %v470, %v613
  %v734 = vmax.f32 %v471, %v616
  %v735 = vmax.f32 %v472, %v619
  %v736 = vmax.f32 %v473, %v622
  %v737 = vmax.f32 %v474, %v625
  %v738 = vmax.f32 %v475, %v628
  %v739 = vmax.f32 %v476, %v631
  %v740 = vmax.f32 %v477, %v634
  %v741 = vmax.f32 %v478, %v637
  %v742 = vmax.f32 %v479, %v640
  %v743 = vmax.f32 %v480, %v643
  %v744 = vmax.f32 %v481, %v646
  %v745 = vmax.f32 %v482, %v649
  %v746 = vmax.f32 %v483, %v652
  %v747 = vmax.f32 %v484, %v655
  %v748 = vmax.f32 %v485, %v658
  %v749 = vmax.f32 %v486, %v661
  %v750 = vmax.f32 %v487, %v664
  %v751 = vmax.f32 %v488, %v667
  %v752 = vmax.f32 %v489, %v670
  %v753 = vmax.f32 %v490, %v673
  %v754 = vmax.f32 %v491, %v676
  %v755 = vmax.f32 %v492, %v679
  %v756 = vmax.f32 %v493, %v682
  %v757 = vmax.f32 %v494, %v685
  %v758 = vmax.f32 %v495, %v688
  %v759 = vmax.f32 %v496, %v691
  %v760 = vmax.f32 %v497, %v694
  %v761 = vmax.f32 %v498, %v697
  %v762 = vmax.f32 %v499, %v700
  %v763 = vmax.f32 %v500, %v703
  %v764 = vmax.f32 %v501, %v706
  %v765 = vmax.f32 %v502, %v709
  %v766 = vmax.f32 %v503, %v712
  %v767 = vmax.f32 %v504, %v715
  %v768 = vmax.f32 %v505, %v718
  %s769 = scalar_lea.vmem %s0, 1176
  %v770 = vld [vmem:[%s769] sm:$0xff]
  %v771 = vld [vmem:[%s769 + $0x8] sm:$0xff]
  %v772 = vld [vmem:[%s769 + $0x10] sm:$0xff]
  %v773 = vld [vmem:[%s769 + $0x18] sm:$0xff]
  %v774 = vld [vmem:[%s769 + $0x20] sm:$0xff]
  %v775 = vld [vmem:[%s769 + $0x28] sm:$0xff]
  %v776 = vld [vmem:[%s769 + $0x30] sm:$0xff]
  %v777 = vld [vmem:[%s769 + $0x38] sm:$0xff]
  %v778 = vld [vmem:[%s769 + $0x40] sm:$0xff]
  %v779 = vld [vmem:[%s769 + $0x48] sm:$0xff]
  %v780 = vld [vmem:[%s769 + $0x50] sm:$0xff]
  %v781 = vld [vmem:[%s769 + $0x58] sm:$0xff]
  %v782 = vld [vmem:[%s769 + $0x60] sm:$0xff]
  %v783 = vld [vmem:[%s769 + $0x68] sm:$0xff]
  %v784 = vld [vmem:[%s769 + $0x70] sm:$0xff]
  %v785 = vld [vmem:[%s769 + $0x78] sm:$0xff]
  %v786 = vld [vmem:[%s769 + $0x80] sm:$0xff]
  %v787 = vld [vmem:[%s769 + $0x88] sm:$0xff]
  %v788 = vld [vmem:[%s769 + $0x90] sm:$0xff]
  %v789 = vld [vmem:[%s769 + $0x98] sm:$0xff]
  %v790 = vld [vmem:[%s769 + $0xa0] sm:$0xff]
  %v791 = vld [vmem:[%s769 + $0xa8] sm:$0xff]
  %v792 = vld [vmem:[%s769 + $0xb0] sm:$0xff]
  %v793 = vld [vmem:[%s769 + $0xb8] sm:$0xff]
  %v794 = vld [vmem:[%s769 + $0xc0] sm:$0xff]
  %v795 = vld [vmem:[%s769 + $0xc8] sm:$0xff]
  %v796 = vld [vmem:[%s769 + $0xd0] sm:$0xff]
  %v797 = vld [vmem:[%s769 + $0xd8] sm:$0xff]
  %v798 = vld [vmem:[%s769 + $0xe0] sm:$0xff]
  %v799 = vld [vmem:[%s769 + $0xe8] sm:$0xff]
  %v800 = vld [vmem:[%s769 + $0xf0] sm:$0xff]
  %v801 = vld [vmem:[%s769 + $0xf8] sm:$0xff]
  %v802 = vld [vmem:[%s769 + $0x100] sm:$0xff]
  %v803 = vld [vmem:[%s769 + $0x108] sm:$0xff]
  %v804 = vld [vmem:[%s769 + $0x110] sm:$0xff]
  %v805 = vld [vmem:[%s769 + $0x118] sm:$0xff]
  %v806 = vld [vmem:[%s769 + $0x120] sm:$0xff]
  %v807 = vld [vmem:[%s769 + $0x128] sm:$0xff]
  %v808 = vld [vmem:[%s769 + $0x130] sm:$0xff]
  %v809 = vld [vmem:[%s769 + $0x138] sm:$0xff]
  %v810 = vld [vmem:[%s769 + $0x140] sm:$0xff]
  %v811 = vld [vmem:[%s769 + $0x148] sm:$0xff]
  %v812 = vld [vmem:[%s769 + $0x150] sm:$0xff]
  %v813 = vld [vmem:[%s769 + $0x158] sm:$0xff]
  %v814 = vld [vmem:[%s769 + $0x160] sm:$0xff]
  %v815 = vld [vmem:[%s769 + $0x168] sm:$0xff]
  %v816 = vld [vmem:[%s769 + $0x170] sm:$0xff]
  %v817 = vld [vmem:[%s769 + $0x178] sm:$0xff]
  %v818 = vld [vmem:[%s769 + $0x180] sm:$0xff]
  %819 = vmatpush.msra.mxu0 %v29
  %820 = vmatpush.msra.mxu0 %v28
  %821 = vmatpush.msra.mxu0 %v27
  %822 = vmatpush.msra.mxu0 %v26
  %823 = vmatpush.msra.mxu0 %v25
  %824 = vmatpush.msra.mxu0 %v24
  %825 = vmatpush.msra.mxu0 %v23
  %826 = vmatpush.msra.mxu0 %v22
  %827 = vmatpush.msra.mxu0 %v21
  %828 = vmatpush.msra.mxu0 %v20
  %829 = vmatpush.msra.mxu0 %v19
  %830 = vmatpush.msra.mxu0 %v18
  %831 = vmatpush.msra.mxu0 %v17
  %832 = vmatpush.msra.mxu0 %v16
  %833 = vmatpush.msra.mxu0 %v15
  %834 = vmatpush.msra.mxu0 %v14
  %835 = vmatmul.f32.gmra.mxu0 %v770
  %v836 = vpop.f32.mrf.mxu0
  %v837 = vadd.f32 0.0, %v836
  %838 = vmatmul.f32.gmra.mxu0 %v771
  %v839 = vpop.f32.mrf.mxu0
  %v840 = vadd.f32 0.0, %v839
  %841 = vmatmul.f32.gmra.mxu0 %v772
  %v842 = vpop.f32.mrf.mxu0
  %v843 = vadd.f32 0.0, %v842
  %844 = vmatmul.f32.gmra.mxu0 %v773
  %v845 = vpop.f32.mrf.mxu0
  %v846 = vadd.f32 0.0, %v845
  %847 = vmatmul.f32.gmra.mxu0 %v774
  %v848 = vpop.f32.mrf.mxu0
  %v849 = vadd.f32 0.0, %v848
  %850 = vmatmul.f32.gmra.mxu0 %v775
  %v851 = vpop.f32.mrf.mxu0
  %v852 = vadd.f32 0.0, %v851
  %853 = vmatmul.f32.gmra.mxu0 %v776
  %v854 = vpop.f32.mrf.mxu0
  %v855 = vadd.f32 0.0, %v854
  %856 = vmatmul.f32.gmra.mxu0 %v777
  %v857 = vpop.f32.mrf.mxu0
  %v858 = vadd.f32 0.0, %v857
  %859 = vmatmul.f32.gmra.mxu0 %v778
  %v860 = vpop.f32.mrf.mxu0
  %v861 = vadd.f32 0.0, %v860
  %862 = vmatmul.f32.gmra.mxu0 %v779
  %v863 = vpop.f32.mrf.mxu0
  %v864 = vadd.f32 0.0, %v863
  %865 = vmatmul.f32.gmra.mxu0 %v780
  %v866 = vpop.f32.mrf.mxu0
  %v867 = vadd.f32 0.0, %v866
  %868 = vmatmul.f32.gmra.mxu0 %v781
  %v869 = vpop.f32.mrf.mxu0
  %v870 = vadd.f32 0.0, %v869
  %871 = vmatmul.f32.gmra.mxu0 %v782
  %v872 = vpop.f32.mrf.mxu0
  %v873 = vadd.f32 0.0, %v872
  %874 = vmatmul.f32.gmra.mxu0 %v783
  %v875 = vpop.f32.mrf.mxu0
  %v876 = vadd.f32 0.0, %v875
  %877 = vmatmul.f32.gmra.mxu0 %v784
  %v878 = vpop.f32.mrf.mxu0
  %v879 = vadd.f32 0.0, %v878
  %880 = vmatmul.f32.gmra.mxu0 %v785
  %v881 = vpop.f32.mrf.mxu0
  %v882 = vadd.f32 0.0, %v881
  %883 = vmatmul.f32.gmra.mxu0 %v786
  %v884 = vpop.f32.mrf.mxu0
  %v885 = vadd.f32 0.0, %v884
  %886 = vmatmul.f32.gmra.mxu0 %v787
  %v887 = vpop.f32.mrf.mxu0
  %v888 = vadd.f32 0.0, %v887
  %889 = vmatmul.f32.gmra.mxu0 %v788
  %v890 = vpop.f32.mrf.mxu0
  %v891 = vadd.f32 0.0, %v890
  %892 = vmatmul.f32.gmra.mxu0 %v789
  %v893 = vpop.f32.mrf.mxu0
  %v894 = vadd.f32 0.0, %v893
  %895 = vmatmul.f32.gmra.mxu0 %v790
  %v896 = vpop.f32.mrf.mxu0
  %v897 = vadd.f32 0.0, %v896
  %898 = vmatmul.f32.gmra.mxu0 %v791
  %v899 = vpop.f32.mrf.mxu0
  %v900 = vadd.f32 0.0, %v899
  %901 = vmatmul.f32.gmra.mxu0 %v792
  %v902 = vpop.f32.mrf.mxu0
  %v903 = vadd.f32 0.0, %v902
  %904 = vmatmul.f32.gmra.mxu0 %v793
  %v905 = vpop.f32.mrf.mxu0
  %v906 = vadd.f32 0.0, %v905
  %907 = vmatmul.f32.gmra.mxu0 %v794
  %v908 = vpop.f32.mrf.mxu0
  %v909 = vadd.f32 0.0, %v908
  %910 = vmatmul.f32.gmra.mxu0 %v795
  %v911 = vpop.f32.mrf.mxu0
  %v912 = vadd.f32 0.0, %v911
  %913 = vmatmul.f32.gmra.mxu0 %v796
  %v914 = vpop.f32.mrf.mxu0
  %v915 = vadd.f32 0.0, %v914
  %916 = vmatmul.f32.gmra.mxu0 %v797
  %v917 = vpop.f32.mrf.mxu0
  %v918 = vadd.f32 0.0, %v917
  %919 = vmatmul.f32.gmra.mxu0 %v798
  %v920 = vpop.f32.mrf.mxu0
  %v921 = vadd.f32 0.0, %v920
  %922 = vmatmul.f32.gmra.mxu0 %v799
  %v923 = vpop.f32.mrf.mxu0
  %v924 = vadd.f32 0.0, %v923
  %925 = vmatmul.f32.gmra.mxu0 %v800
  %v926 = vpop.f32.mrf.mxu0
  %v927 = vadd.f32 0.0, %v926
  %928 = vmatmul.f32.gmra.mxu0 %v801
  %v929 = vpop.f32.mrf.mxu0
  %v930 = vadd.f32 0.0, %v929
  %931 = vmatmul.f32.gmra.mxu0 %v802
  %v932 = vpop.f32.mrf.mxu0
  %v933 = vadd.f32 0.0, %v932
  %934 = vmatmul.f32.gmra.mxu0 %v803
  %v935 = vpop.f32.mrf.mxu0
  %v936 = vadd.f32 0.0, %v935
  %937 = vmatmul.f32.gmra.mxu0 %v804
  %v938 = vpop.f32.mrf.mxu0
  %v939 = vadd.f32 0.0, %v938
  %940 = vmatmul.f32.gmra.mxu0 %v805
  %v941 = vpop.f32.mrf.mxu0
  %v942 = vadd.f32 0.0, %v941
  %943 = vmatmul.f32.gmra.mxu0 %v806
  %v944 = vpop.f32.mrf.mxu0
  %v945 = vadd.f32 0.0, %v944
  %946 = vmatmul.f32.gmra.mxu0 %v807
  %v947 = vpop.f32.mrf.mxu0
  %v948 = vadd.f32 0.0, %v947
  %949 = vmatmul.f32.gmra.mxu0 %v808
  %v950 = vpop.f32.mrf.mxu0
  %v951 = vadd.f32 0.0, %v950
  %952 = vmatmul.f32.gmra.mxu0 %v809
  %v953 = vpop.f32.mrf.mxu0
  %v954 = vadd.f32 0.0, %v953
  %955 = vmatmul.f32.gmra.mxu0 %v810
  %v956 = vpop.f32.mrf.mxu0
  %v957 = vadd.f32 0.0, %v956
  %958 = vmatmul.f32.gmra.mxu0 %v811
  %v959 = vpop.f32.mrf.mxu0
  %v960 = vadd.f32 0.0, %v959
  %961 = vmatmul.f32.gmra.mxu0 %v812
  %v962 = vpop.f32.mrf.mxu0
  %v963 = vadd.f32 0.0, %v962
  %964 = vmatmul.f32.gmra.mxu0 %v813
  %v965 = vpop.f32.mrf.mxu0
  %v966 = vadd.f32 0.0, %v965
  %967 = vmatmul.f32.gmra.mxu0 %v814
  %v968 = vpop.f32.mrf.mxu0
  %v969 = vadd.f32 0.0, %v968
  %970 = vmatmul.f32.gmra.mxu0 %v815
  %v971 = vpop.f32.mrf.mxu0
  %v972 = vadd.f32 0.0, %v971
  %973 = vmatmul.f32.gmra.mxu0 %v816
  %v974 = vpop.f32.mrf.mxu0
  %v975 = vadd.f32 0.0, %v974
  %976 = vmatmul.f32.gmra.mxu0 %v817
  %v977 = vpop.f32.mrf.mxu0
  %v978 = vadd.f32 0.0, %v977
  %979 = vmatmul.f32.gmra.mxu0 %v818
  %v980 = vpop.f32.mrf.mxu0
  %v981 = vadd.f32 0.0, %v980
  %982 = vdwg.mxu0
  %v983 = vmax.f32 %v720, %v837
  %v984 = vmax.f32 %v721, %v840
  %v985 = vmax.f32 %v722, %v843
  %v986 = vmax.f32 %v723, %v846
  %v987 = vmax.f32 %v724, %v849
  %v988 = vmax.f32 %v725, %v852
  %v989 = vmax.f32 %v726, %v855
  %v990 = vmax.f32 %v727, %v858
  %v991 = vmax.f32 %v728, %v861
  %v992 = vmax.f32 %v729, %v864
  %v993 = vmax.f32 %v730, %v867
  %v994 = vmax.f32 %v731, %v870
  %v995 = vmax.f32 %v732, %v873
  %v996 = vmax.f32 %v733, %v876
  %v997 = vmax.f32 %v734, %v879
  %v998 = vmax.f32 %v735, %v882
  %v999 = vmax.f32 %v736, %v885
  %v1000 = vmax.f32 %v737, %v888
  %v1001 = vmax.f32 %v738, %v891
  %v1002 = vmax.f32 %v739, %v894
  %v1003 = vmax.f32 %v740, %v897
  %v1004 = vmax.f32 %v741, %v900
  %v1005 = vmax.f32 %v742, %v903
  %v1006 = vmax.f32 %v743, %v906
  %v1007 = vmax.f32 %v744, %v909
  %v1008 = vmax.f32 %v745, %v912
  %v1009 = vmax.f32 %v746, %v915
  %v1010 = vmax.f32 %v747, %v918
  %v1011 = vmax.f32 %v748, %v921
  %v1012 = vmax.f32 %v749, %v924
  %v1013 = vmax.f32 %v750, %v927
  %v1014 = vmax.f32 %v751, %v930
  %v1015 = vmax.f32 %v752, %v933
  %v1016 = vmax.f32 %v753, %v936
  %v1017 = vmax.f32 %v754, %v939
  %v1018 = vmax.f32 %v755, %v942
  %v1019 = vmax.f32 %v756, %v945
  %v1020 = vmax.f32 %v757, %v948
  %v1021 = vmax.f32 %v758, %v951
  %v1022 = vmax.f32 %v759, %v954
  %v1023 = vmax.f32 %v760, %v957
  %v1024 = vmax.f32 %v761, %v960
  %v1025 = vmax.f32 %v762, %v963
  %v1026 = vmax.f32 %v763, %v966
  %v1027 = vmax.f32 %v764, %v969
  %v1028 = vmax.f32 %v765, %v972
  %v1029 = vmax.f32 %v766, %v975
  %v1030 = vmax.f32 %v767, %v978
  %v1031 = vmax.f32 %v768, %v981
  %v1032 = vld [vmem:[%s2] sm:$0x1]
  %v1034 = vperm.slane %v1032, 0
  %v1036 = vadd.f32 %v983, %v1034
  %v1037 = vadd.f32 %v984, %v1034
  %v1038 = vadd.f32 %v985, %v1034
  %v1039 = vadd.f32 %v986, %v1034
  %v1040 = vadd.f32 %v987, %v1034
  %v1041 = vadd.f32 %v988, %v1034
  %v1042 = vadd.f32 %v989, %v1034
  %v1043 = vadd.f32 %v990, %v1034
  %v1044 = vadd.f32 %v991, %v1034
  %v1045 = vadd.f32 %v992, %v1034
  %v1046 = vadd.f32 %v993, %v1034
  %v1047 = vadd.f32 %v994, %v1034
  %v1048 = vadd.f32 %v995, %v1034
  %v1049 = vadd.f32 %v996, %v1034
  %v1050 = vadd.f32 %v997, %v1034
  %v1051 = vadd.f32 %v998, %v1034
  %v1052 = vadd.f32 %v999, %v1034
  %v1053 = vadd.f32 %v1000, %v1034
  %v1054 = vadd.f32 %v1001, %v1034
  %v1055 = vadd.f32 %v1002, %v1034
  %v1056 = vadd.f32 %v1003, %v1034
  %v1057 = vadd.f32 %v1004, %v1034
  %v1058 = vadd.f32 %v1005, %v1034
  %v1059 = vadd.f32 %v1006, %v1034
  %v1060 = vadd.f32 %v1007, %v1034
  %v1061 = vadd.f32 %v1008, %v1034
  %v1062 = vadd.f32 %v1009, %v1034
  %v1063 = vadd.f32 %v1010, %v1034
  %v1064 = vadd.f32 %v1011, %v1034
  %v1065 = vadd.f32 %v1012, %v1034
  %v1066 = vadd.f32 %v1013, %v1034
  %v1067 = vadd.f32 %v1014, %v1034
  %v1068 = vadd.f32 %v1015, %v1034
  %v1069 = vadd.f32 %v1016, %v1034
  %v1070 = vadd.f32 %v1017, %v1034
  %v1071 = vadd.f32 %v1018, %v1034
  %v1072 = vadd.f32 %v1019, %v1034
  %v1073 = vadd.f32 %v1020, %v1034
  %v1074 = vadd.f32 %v1021, %v1034
  %v1075 = vadd.f32 %v1022, %v1034
  %v1076 = vadd.f32 %v1023, %v1034
  %v1077 = vadd.f32 %v1024, %v1034
  %v1078 = vadd.f32 %v1025, %v1034
  %v1079 = vadd.f32 %v1026, %v1034
  %v1080 = vadd.f32 %v1027, %v1034
  %v1081 = vadd.f32 %v1028, %v1034
  %v1082 = vadd.f32 %v1029, %v1034
  %v1083 = vadd.f32 %v1030, %v1034
  %v1084 = vadd.f32 %v1031, %v1034
  %v1085 = vmax.f32 %v1036, 0.0
  %v1086 = vmax.f32 %v1037, 0.0
  %v1087 = vmax.f32 %v1038, 0.0
  %v1088 = vmax.f32 %v1039, 0.0
  %v1089 = vmax.f32 %v1040, 0.0
  %v1090 = vmax.f32 %v1041, 0.0
  %v1091 = vmax.f32 %v1042, 0.0
  %v1092 = vmax.f32 %v1043, 0.0
  %v1093 = vmax.f32 %v1044, 0.0
  %v1094 = vmax.f32 %v1045, 0.0
  %v1095 = vmax.f32 %v1046, 0.0
  %v1096 = vmax.f32 %v1047, 0.0
  %v1097 = vmax.f32 %v1048, 0.0
  %v1098 = vmax.f32 %v1049, 0.0
  %v1099 = vmax.f32 %v1050, 0.0
  %v1100 = vmax.f32 %v1051, 0.0
  %v1101 = vmax.f32 %v1052, 0.0
  %v1102 = vmax.f32 %v1053, 0.0
  %v1103 = vmax.f32 %v1054, 0.0
  %v1104 = vmax.f32 %v1055, 0.0
  %v1105 = vmax.f32 %v1056, 0.0
  %v1106 = vmax.f32 %v1057, 0.0
  %v1107 = vmax.f32 %v1058, 0.0
  %v1108 = vmax.f32 %v1059, 0.0
  %v1109 = vmax.f32 %v1060, 0.0
  %v1110 = vmax.f32 %v1061, 0.0
  %v1111 = vmax.f32 %v1062, 0.0
  %v1112 = vmax.f32 %v1063, 0.0
  %v1113 = vmax.f32 %v1064, 0.0
  %v1114 = vmax.f32 %v1065, 0.0
  %v1115 = vmax.f32 %v1066, 0.0
  %v1116 = vmax.f32 %v1067, 0.0
  %v1117 = vmax.f32 %v1068, 0.0
  %v1118 = vmax.f32 %v1069, 0.0
  %v1119 = vmax.f32 %v1070, 0.0
  %v1120 = vmax.f32 %v1071, 0.0
  %v1121 = vmax.f32 %v1072, 0.0
  %v1122 = vmax.f32 %v1073, 0.0
  %v1123 = vmax.f32 %v1074, 0.0
  %v1124 = vmax.f32 %v1075, 0.0
  %v1125 = vmax.f32 %v1076, 0.0
  %v1126 = vmax.f32 %v1077, 0.0
  %v1127 = vmax.f32 %v1078, 0.0
  %v1128 = vmax.f32 %v1079, 0.0
  %v1129 = vmax.f32 %v1080, 0.0
  %v1130 = vmax.f32 %v1081, 0.0
  %v1131 = vmax.f32 %v1082, 0.0
  %v1132 = vmax.f32 %v1083, 0.0
  %v1133 = vmax.f32 %v1084, 0.0
  %1134 = vst [vmem:[%s3] sm:$0xff] %v1085
  %1135 = vst [vmem:[%s3 + $0x8] sm:$0xff] %v1086
  %1136 = vst [vmem:[%s3 + $0x10] sm:$0xff] %v1087
  %1137 = vst [vmem:[%s3 + $0x18] sm:$0xff] %v1088
  %1138 = vst [vmem:[%s3 + $0x20] sm:$0xff] %v1089
  %1139 = vst [vmem:[%s3 + $0x28] sm:$0xff] %v1090
  %1140 = vst [vmem:[%s3 + $0x30] sm:$0xff] %v1091
  %1141 = vst [vmem:[%s3 + $0x38] sm:$0xff] %v1092
  %1142 = vst [vmem:[%s3 + $0x40] sm:$0xff] %v1093
  %1143 = vst [vmem:[%s3 + $0x48] sm:$0xff] %v1094
  %1144 = vst [vmem:[%s3 + $0x50] sm:$0xff] %v1095
  %1145 = vst [vmem:[%s3 + $0x58] sm:$0xff] %v1096
  %1146 = vst [vmem:[%s3 + $0x60] sm:$0xff] %v1097
  %1147 = vst [vmem:[%s3 + $0x68] sm:$0xff] %v1098
  %1148 = vst [vmem:[%s3 + $0x70] sm:$0xff] %v1099
  %1149 = vst [vmem:[%s3 + $0x78] sm:$0xff] %v1100
  %1150 = vst [vmem:[%s3 + $0x80] sm:$0xff] %v1101
  %1151 = vst [vmem:[%s3 + $0x88] sm:$0xff] %v1102
  %1152 = vst [vmem:[%s3 + $0x90] sm:$0xff] %v1103
  %1153 = vst [vmem:[%s3 + $0x98] sm:$0xff] %v1104
  %1154 = vst [vmem:[%s3 + $0xa0] sm:$0xff] %v1105
  %1155 = vst [vmem:[%s3 + $0xa8] sm:$0xff] %v1106
  %1156 = vst [vmem:[%s3 + $0xb0] sm:$0xff] %v1107
  %1157 = vst [vmem:[%s3 + $0xb8] sm:$0xff] %v1108
  %1158 = vst [vmem:[%s3 + $0xc0] sm:$0xff] %v1109
  %1159 = vst [vmem:[%s3 + $0xc8] sm:$0xff] %v1110
  %1160 = vst [vmem:[%s3 + $0xd0] sm:$0xff] %v1111
  %1161 = vst [vmem:[%s3 + $0xd8] sm:$0xff] %v1112
  %1162 = vst [vmem:[%s3 + $0xe0] sm:$0xff] %v1113
  %1163 = vst [vmem:[%s3 + $0xe8] sm:$0xff] %v1114
  %1164 = vst [vmem:[%s3 + $0xf0] sm:$0xff] %v1115
  %1165 = vst [vmem:[%s3 + $0xf8] sm:$0xff] %v1116
  %1166 = vst [vmem:[%s3 + $0x100] sm:$0xff] %v1117
  %1167 = vst [vmem:[%s3 + $0x108] sm:$0xff] %v1118
  %1168 = vst [vmem:[%s3 + $0x110] sm:$0xff] %v1119
  %1169 = vst [vmem:[%s3 + $0x118] sm:$0xff] %v1120
  %1170 = vst [vmem:[%s3 + $0x120] sm:$0xff] %v1121
  %1171 = vst [vmem:[%s3 + $0x128] sm:$0xff] %v1122
  %1172 = vst [vmem:[%s3 + $0x130] sm:$0xff] %v1123
  %1173 = vst [vmem:[%s3 + $0x138] sm:$0xff] %v1124
  %1174 = vst [vmem:[%s3 + $0x140] sm:$0xff] %v1125
  %1175 = vst [vmem:[%s3 + $0x148] sm:$0xff] %v1126
  %1176 = vst [vmem:[%s3 + $0x150] sm:$0xff] %v1127
  %1177 = vst [vmem:[%s3 + $0x158] sm:$0xff] %v1128
  %1178 = vst [vmem:[%s3 + $0x160] sm:$0xff] %v1129
  %1179 = vst [vmem:[%s3 + $0x168] sm:$0xff] %v1130
  %1180 = vst [vmem:[%s3 + $0x170] sm:$0xff] %v1131
  %1181 = vst [vmem:[%s3 + $0x178] sm:$0xff] %v1132
  %1182 = vst [vmem:[%s3 + $0x180] sm:$0xff] %v1133
  // Predicated region
  $region14: #{neural_net_forward.3} parent=0 // pred_check
    _
  $region15: #{neural_net_forward.3} parent=0 // pred_check_branch
    %1184 = sbr.rel (0) target = $region17
  $region16: #{neural_net_forward.3} parent=0 // pred_region
    _
  $region17: #{neural_net_forward.3} parent=0 // pred_fallthru
    _
  // Predicated region
  $region18: #{neural_net_forward.3} parent=0 // pred_check
    _
  $region19: #{neural_net_forward.3} parent=0 // pred_check_branch
    %1186 = sbr.rel (0) target = $region21
  $region20: #{neural_net_forward.3} parent=0 // pred_region
    _
  $region21: #{neural_net_forward.3} parent=0 // pred_fallthru
    _

// kernel: neural_net_forward.4
$region0: #{neural_net_forward.4}
  #allocation0 [shape = 'u32[]', space=smem, size = 0x4, offset = 0x4, fixed_abs, tag = 'smem constant byte address 0x4 - core index']
  #allocation1 [shape = 'u32[72,128]{1,0:T(1,128)}', space=vmem, size = 0x9000, scoped, tag = 'internal scratch']
  %s0 = inlined_call_operand.vmem [shape: f32[4,56,256], index: 0, kind: input, shape index: {}]
  %s1 = inlined_call_operand.vmem [shape: f32[256,128], index: 1, kind: input, shape index: {}]
  %s2 = inlined_call_operand.vmem [shape: f32[1,128], index: 2, kind: input, shape index: {}]
  %s3 = inlined_call_operand.vmem [shape: f32[56,128], index: 3, kind: output, shape index: {}]
  %s4 = sld [smem:[#allocation0]]
  $region22: #{neural_net_forward.4} parent=0
    _
  %s6 = ssub.s32 1, %s4
  %s7 = scalar_select 0, %s6, %s4
  // Predicated region
  $region2: #{neural_net_forward.4} parent=0 // pred_check
    _
  $region3: #{neural_net_forward.4} parent=0 // pred_check_branch
    %9 = sbr.rel (0) target = $region5
  $region4: #{neural_net_forward.4} parent=0 // pred_region
    _
  $region5: #{neural_net_forward.4} parent=0 // pred_fallthru
    _
  // Predicated region
  $region6: #{neural_net_forward.4} parent=0 // pred_check
    _
  $region7: #{neural_net_forward.4} parent=0 // pred_check_branch
    %11 = sbr.rel (0) target = $region9
  $region8: #{neural_net_forward.4} parent=0 // pred_region
    _
  $region9: #{neural_net_forward.4} parent=0 // pred_fallthru
    _
  // Predicated region
  $region10: #{neural_net_forward.4} parent=0 // pred_check
    _
  $region11: #{neural_net_forward.4} parent=0 // pred_check_branch
    %13 = sbr.rel (0) target = $region13
  $region12: #{neural_net_forward.4} parent=0 // pred_region
    _
  $region13: #{neural_net_forward.4} parent=0 // pred_fallthru
    _
  %v14 = vld [vmem:[%s1] sm:$0xff]
  %v15 = vld [vmem:[%s1 + $0x8] sm:$0xff]
  %v16 = vld [vmem:[%s1 + $0x10] sm:$0xff]
  %v17 = vld [vmem:[%s1 + $0x18] sm:$0xff]
  %v18 = vld [vmem:[%s1 + $0x20] sm:$0xff]
  %v19 = vld [vmem:[%s1 + $0x28] sm:$0xff]
  %v20 = vld [vmem:[%s1 + $0x30] sm:$0xff]
  %v21 = vld [vmem:[%s1 + $0x38] sm:$0xff]
  %v22 = vld [vmem:[%s1 + $0x40] sm:$0xff]
  %v23 = vld [vmem:[%s1 + $0x48] sm:$0xff]
  %v24 = vld [vmem:[%s1 + $0x50] sm:$0xff]
  %v25 = vld [vmem:[%s1 + $0x58] sm:$0xff]
  %v26 = vld [vmem:[%s1 + $0x60] sm:$0xff]
  %v27 = vld [vmem:[%s1 + $0x68] sm:$0xff]
  %v28 = vld [vmem:[%s1 + $0x70] sm:$0xff]
  %v29 = vld [vmem:[%s1 + $0x78] sm:$0xff]
  %v30 = vld [vmem:[%s1 + $0x80] sm:$0xff]
  %v31 = vld [vmem:[%s1 + $0x88] sm:$0xff]
  %v32 = vld [vmem:[%s1 + $0x90] sm:$0xff]
  %v33 = vld [vmem:[%s1 + $0x98] sm:$0xff]
  %v34 = vld [vmem:[%s1 + $0xa0] sm:$0xff]
  %v35 = vld [vmem:[%s1 + $0xa8] sm:$0xff]
  %v36 = vld [vmem:[%s1 + $0xb0] sm:$0xff]
  %v37 = vld [vmem:[%s1 + $0xb8] sm:$0xff]
  %v38 = vld [vmem:[%s1 + $0xc0] sm:$0xff]
  %v39 = vld [vmem:[%s1 + $0xc8] sm:$0xff]
  %v40 = vld [vmem:[%s1 + $0xd0] sm:$0xff]
  %v41 = vld [vmem:[%s1 + $0xd8] sm:$0xff]
  %v42 = vld [vmem:[%s1 + $0xe0] sm:$0xff]
  %v43 = vld [vmem:[%s1 + $0xe8] sm:$0xff]
  %v44 = vld [vmem:[%s1 + $0xf0] sm:$0xff]
  %v45 = vld [vmem:[%s1 + $0xf8] sm:$0xff]
  %v46 = vld [vmem:[%s0] sm:$0xff]
  %v47 = vld [vmem:[%s0 + $0x8] sm:$0xff]
  %v48 = vld [vmem:[%s0 + $0x10] sm:$0xff]
  %v49 = vld [vmem:[%s0 + $0x18] sm:$0xff]
  %v50 = vld [vmem:[%s0 + $0x20] sm:$0xff]
  %v51 = vld [vmem:[%s0 + $0x28] sm:$0xff]
  %v52 = vld [vmem:[%s0 + $0x30] sm:$0xff]
  %v53 = vld [vmem:[%s0 + $0x38] sm:$0xff]
  %v54 = vld [vmem:[%s0 + $0x40] sm:$0xff]
  %v55 = vld [vmem:[%s0 + $0x48] sm:$0xff]
  %v56 = vld [vmem:[%s0 + $0x50] sm:$0xff]
  %v57 = vld [vmem:[%s0 + $0x58] sm:$0xff]
  %v58 = vld [vmem:[%s0 + $0x60] sm:$0xff]
  %v59 = vld [vmem:[%s0 + $0x68] sm:$0xff]
  %60 = vmatpush.msra.mxu0 %v29
  %61 = vmatpush.msra.mxu0 %v28
  %62 = vmatpush.msra.mxu0 %v27
  %63 = vmatpush.msra.mxu0 %v26
  %64 = vmatpush.msra.mxu0 %v25
  %65 = vmatpush.msra.mxu0 %v24
  %66 = vmatpush.msra.mxu0 %v23
  %67 = vmatpush.msra.mxu0 %v22
  %68 = vmatpush.msra.mxu0 %v21
  %69 = vmatpush.msra.mxu0 %v20
  %70 = vmatpush.msra.mxu0 %v19
  %71 = vmatpush.msra.mxu0 %v18
  %72 = vmatpush.msra.mxu0 %v17
  %73 = vmatpush.msra.mxu0 %v16
  %74 = vmatpush.msra.mxu0 %v15
  %75 = vmatpush.msra.mxu0 %v14
  %76 = vmatmul.f32.gmra.mxu0 %v46
  %v77 = vpop.f32.mrf.mxu0
  %v78 = vadd.f32 0.0, %v77
  %79 = vmatmul.f32.gmra.mxu0 %v48
  %v80 = vpop.f32.mrf.mxu0
  %v81 = vadd.f32 0.0, %v80
  %82 = vmatmul.f32.gmra.mxu0 %v50
  %v83 = vpop.f32.mrf.mxu0
  %v84 = vadd.f32 0.0, %v83
  %85 = vmatmul.f32.gmra.mxu0 %v52
  %v86 = vpop.f32.mrf.mxu0
  %v87 = vadd.f32 0.0, %v86
  %88 = vmatmul.f32.gmra.mxu0 %v54
  %v89 = vpop.f32.mrf.mxu0
  %v90 = vadd.f32 0.0, %v89
  %91 = vmatmul.f32.gmra.mxu0 %v56
  %v92 = vpop.f32.mrf.mxu0
  %v93 = vadd.f32 0.0, %v92
  %94 = vmatmul.f32.gmra.mxu0 %v58
  %v95 = vpop.f32.mrf.mxu0
  %v96 = vadd.f32 0.0, %v95
  %97 = vdwg.mxu0
  %98 = vmatpush.msra.mxu0 %v45
  %99 = vmatpush.msra.mxu0 %v44
  %100 = vmatpush.msra.mxu0 %v43
  %101 = vmatpush.msra.mxu0 %v42
  %102 = vmatpush.msra.mxu0 %v41
  %103 = vmatpush.msra.mxu0 %v40
  %104 = vmatpush.msra.mxu0 %v39
  %105 = vmatpush.msra.mxu0 %v38
  %106 = vmatpush.msra.mxu0 %v37
  %107 = vmatpush.msra.mxu0 %v36
  %108 = vmatpush.msra.mxu0 %v35
  %109 = vmatpush.msra.mxu0 %v34
  %110 = vmatpush.msra.mxu0 %v33
  %111 = vmatpush.msra.mxu0 %v32
  %112 = vmatpush.msra.mxu0 %v31
  %113 = vmatpush.msra.mxu0 %v30
  %114 = vmatmul.f32.gmra.mxu0 %v47
  %v115 = vpop.f32.mrf.mxu0
  %v116 = vadd.f32 %v78, %v115
  %117 = vmatmul.f32.gmra.mxu0 %v49
  %v118 = vpop.f32.mrf.mxu0
  %v119 = vadd.f32 %v81, %v118
  %120 = vmatmul.f32.gmra.mxu0 %v51
  %v121 = vpop.f32.mrf.mxu0
  %v122 = vadd.f32 %v84, %v121
  %123 = vmatmul.f32.gmra.mxu0 %v53
  %v124 = vpop.f32.mrf.mxu0
  %v125 = vadd.f32 %v87, %v124
  %126 = vmatmul.f32.gmra.mxu0 %v55
  %v127 = vpop.f32.mrf.mxu0
  %v128 = vadd.f32 %v90, %v127
  %129 = vmatmul.f32.gmra.mxu0 %v57
  %v130 = vpop.f32.mrf.mxu0
  %v131 = vadd.f32 %v93, %v130
  %132 = vmatmul.f32.gmra.mxu0 %v59
  %v133 = vpop.f32.mrf.mxu0
  %v134 = vadd.f32 %v96, %v133
  %135 = vdwg.mxu0
  %s136 = scalar_lea.vmem %s0, 112
  %v137 = vld [vmem:[%s136] sm:$0xff]
  %v138 = vld [vmem:[%s136 + $0x8] sm:$0xff]
  %v139 = vld [vmem:[%s136 + $0x10] sm:$0xff]
  %v140 = vld [vmem:[%s136 + $0x18] sm:$0xff]
  %v141 = vld [vmem:[%s136 + $0x20] sm:$0xff]
  %v142 = vld [vmem:[%s136 + $0x28] sm:$0xff]
  %v143 = vld [vmem:[%s136 + $0x30] sm:$0xff]
  %v144 = vld [vmem:[%s136 + $0x38] sm:$0xff]
  %v145 = vld [vmem:[%s136 + $0x40] sm:$0xff]
  %v146 = vld [vmem:[%s136 + $0x48] sm:$0xff]
  %v147 = vld [vmem:[%s136 + $0x50] sm:$0xff]
  %v148 = vld [vmem:[%s136 + $0x58] sm:$0xff]
  %v149 = vld [vmem:[%s136 + $0x60] sm:$0xff]
  %v150 = vld [vmem:[%s136 + $0x68] sm:$0xff]
  %151 = vmatpush.msra.mxu0 %v29
  %152 = vmatpush.msra.mxu0 %v28
  %153 = vmatpush.msra.mxu0 %v27
  %154 = vmatpush.msra.mxu0 %v26
  %155 = vmatpush.msra.mxu0 %v25
  %156 = vmatpush.msra.mxu0 %v24
  %157 = vmatpush.msra.mxu0 %v23
  %158 = vmatpush.msra.mxu0 %v22
  %159 = vmatpush.msra.mxu0 %v21
  %160 = vmatpush.msra.mxu0 %v20
  %161 = vmatpush.msra.mxu0 %v19
  %162 = vmatpush.msra.mxu0 %v18
  %163 = vmatpush.msra.mxu0 %v17
  %164 = vmatpush.msra.mxu0 %v16
  %165 = vmatpush.msra.mxu0 %v15
  %166 = vmatpush.msra.mxu0 %v14
  %167 = vmatmul.f32.gmra.mxu0 %v137
  %v168 = vpop.f32.mrf.mxu0
  %v169 = vadd.f32 0.0, %v168
  %170 = vmatmul.f32.gmra.mxu0 %v139
  %v171 = vpop.f32.mrf.mxu0
  %v172 = vadd.f32 0.0, %v171
  %173 = vmatmul.f32.gmra.mxu0 %v141
  %v174 = vpop.f32.mrf.mxu0
  %v175 = vadd.f32 0.0, %v174
  %176 = vmatmul.f32.gmra.mxu0 %v143
  %v177 = vpop.f32.mrf.mxu0
  %v178 = vadd.f32 0.0, %v177
  %179 = vmatmul.f32.gmra.mxu0 %v145
  %v180 = vpop.f32.mrf.mxu0
  %v181 = vadd.f32 0.0, %v180
  %182 = vmatmul.f32.gmra.mxu0 %v147
  %v183 = vpop.f32.mrf.mxu0
  %v184 = vadd.f32 0.0, %v183
  %185 = vmatmul.f32.gmra.mxu0 %v149
  %v186 = vpop.f32.mrf.mxu0
  %v187 = vadd.f32 0.0, %v186
  %188 = vdwg.mxu0
  %189 = vmatpush.msra.mxu0 %v45
  %190 = vmatpush.msra.mxu0 %v44
  %191 = vmatpush.msra.mxu0 %v43
  %192 = vmatpush.msra.mxu0 %v42
  %193 = vmatpush.msra.mxu0 %v41
  %194 = vmatpush.msra.mxu0 %v40
  %195 = vmatpush.msra.mxu0 %v39
  %196 = vmatpush.msra.mxu0 %v38
  %197 = vmatpush.msra.mxu0 %v37
  %198 = vmatpush.msra.mxu0 %v36
  %199 = vmatpush.msra.mxu0 %v35
  %200 = vmatpush.msra.mxu0 %v34
  %201 = vmatpush.msra.mxu0 %v33
  %202 = vmatpush.msra.mxu0 %v32
  %203 = vmatpush.msra.mxu0 %v31
  %204 = vmatpush.msra.mxu0 %v30
  %205 = vmatmul.f32.gmra.mxu0 %v138
  %v206 = vpop.f32.mrf.mxu0
  %v207 = vadd.f32 %v169, %v206
  %208 = vmatmul.f32.gmra.mxu0 %v140
  %v209 = vpop.f32.mrf.mxu0
  %v210 = vadd.f32 %v172, %v209
  %211 = vmatmul.f32.gmra.mxu0 %v142
  %v212 = vpop.f32.mrf.mxu0
  %v213 = vadd.f32 %v175, %v212
  %214 = vmatmul.f32.gmra.mxu0 %v144
  %v215 = vpop.f32.mrf.mxu0
  %v216 = vadd.f32 %v178, %v215
  %217 = vmatmul.f32.gmra.mxu0 %v146
  %v218 = vpop.f32.mrf.mxu0
  %v219 = vadd.f32 %v181, %v218
  %220 = vmatmul.f32.gmra.mxu0 %v148
  %v221 = vpop.f32.mrf.mxu0
  %v222 = vadd.f32 %v184, %v221
  %223 = vmatmul.f32.gmra.mxu0 %v150
  %v224 = vpop.f32.mrf.mxu0
  %v225 = vadd.f32 %v187, %v224
  %226 = vdwg.mxu0
  %v227 = vmax.f32 %v116, %v207
  %v228 = vmax.f32 %v119, %v210
  %v229 = vmax.f32 %v122, %v213
  %v230 = vmax.f32 %v125, %v216
  %v231 = vmax.f32 %v128, %v219
  %v232 = vmax.f32 %v131, %v222
  %v233 = vmax.f32 %v134, %v225
  %s234 = scalar_lea.vmem %s0, 224
  %v235 = vld [vmem:[%s234] sm:$0xff]
  %v236 = vld [vmem:[%s234 + $0x8] sm:$0xff]
  %v237 = vld [vmem:[%s234 + $0x10] sm:$0xff]
  %v238 = vld [vmem:[%s234 + $0x18] sm:$0xff]
  %v239 = vld [vmem:[%s234 + $0x20] sm:$0xff]
  %v240 = vld [vmem:[%s234 + $0x28] sm:$0xff]
  %v241 = vld [vmem:[%s234 + $0x30] sm:$0xff]
  %v242 = vld [vmem:[%s234 + $0x38] sm:$0xff]
  %v243 = vld [vmem:[%s234 + $0x40] sm:$0xff]
  %v244 = vld [vmem:[%s234 + $0x48] sm:$0xff]
  %v245 = vld [vmem:[%s234 + $0x50] sm:$0xff]
  %v246 = vld [vmem:[%s234 + $0x58] sm:$0xff]
  %v247 = vld [vmem:[%s234 + $0x60] sm:$0xff]
  %v248 = vld [vmem:[%s234 + $0x68] sm:$0xff]
  %249 = vmatpush.msra.mxu0 %v29
  %250 = vmatpush.msra.mxu0 %v28
  %251 = vmatpush.msra.mxu0 %v27
  %252 = vmatpush.msra.mxu0 %v26
  %253 = vmatpush.msra.mxu0 %v25
  %254 = vmatpush.msra.mxu0 %v24
  %255 = vmatpush.msra.mxu0 %v23
  %256 = vmatpush.msra.mxu0 %v22
  %257 = vmatpush.msra.mxu0 %v21
  %258 = vmatpush.msra.mxu0 %v20
  %259 = vmatpush.msra.mxu0 %v19
  %260 = vmatpush.msra.mxu0 %v18
  %261 = vmatpush.msra.mxu0 %v17
  %262 = vmatpush.msra.mxu0 %v16
  %263 = vmatpush.msra.mxu0 %v15
  %264 = vmatpush.msra.mxu0 %v14
  %265 = vmatmul.f32.gmra.mxu0 %v235
  %v266 = vpop.f32.mrf.mxu0
  %v267 = vadd.f32 0.0, %v266
  %268 = vmatmul.f32.gmra.mxu0 %v237
  %v269 = vpop.f32.mrf.mxu0
  %v270 = vadd.f32 0.0, %v269
  %271 = vmatmul.f32.gmra.mxu0 %v239
  %v272 = vpop.f32.mrf.mxu0
  %v273 = vadd.f32 0.0, %v272
  %274 = vmatmul.f32.gmra.mxu0 %v241
  %v275 = vpop.f32.mrf.mxu0
  %v276 = vadd.f32 0.0, %v275
  %277 = vmatmul.f32.gmra.mxu0 %v243
  %v278 = vpop.f32.mrf.mxu0
  %v279 = vadd.f32 0.0, %v278
  %280 = vmatmul.f32.gmra.mxu0 %v245
  %v281 = vpop.f32.mrf.mxu0
  %v282 = vadd.f32 0.0, %v281
  %283 = vmatmul.f32.gmra.mxu0 %v247
  %v284 = vpop.f32.mrf.mxu0
  %v285 = vadd.f32 0.0, %v284
  %286 = vdwg.mxu0
  %287 = vmatpush.msra.mxu0 %v45
  %288 = vmatpush.msra.mxu0 %v44
  %289 = vmatpush.msra.mxu0 %v43
  %290 = vmatpush.msra.mxu0 %v42
  %291 = vmatpush.msra.mxu0 %v41
  %292 = vmatpush.msra.mxu0 %v40
  %293 = vmatpush.msra.mxu0 %v39
  %294 = vmatpush.msra.mxu0 %v38
  %295 = vmatpush.msra.mxu0 %v37
  %296 = vmatpush.msra.mxu0 %v36
  %297 = vmatpush.msra.mxu0 %v35
  %298 = vmatpush.msra.mxu0 %v34
  %299 = vmatpush.msra.mxu0 %v33
  %300 = vmatpush.msra.mxu0 %v32
  %301 = vmatpush.msra.mxu0 %v31
  %302 = vmatpush.msra.mxu0 %v30
  %303 = vmatmul.f32.gmra.mxu0 %v236
  %v304 = vpop.f32.mrf.mxu0
  %v305 = vadd.f32 %v267, %v304
  %306 = vmatmul.f32.gmra.mxu0 %v238
  %v307 = vpop.f32.mrf.mxu0
  %v308 = vadd.f32 %v270, %v307
  %309 = vmatmul.f32.gmra.mxu0 %v240
  %v310 = vpop.f32.mrf.mxu0
  %v311 = vadd.f32 %v273, %v310
  %312 = vmatmul.f32.gmra.mxu0 %v242
  %v313 = vpop.f32.mrf.mxu0
  %v314 = vadd.f32 %v276, %v313
  %315 = vmatmul.f32.gmra.mxu0 %v244
  %v316 = vpop.f32.mrf.mxu0
  %v317 = vadd.f32 %v279, %v316
  %318 = vmatmul.f32.gmra.mxu0 %v246
  %v319 = vpop.f32.mrf.mxu0
  %v320 = vadd.f32 %v282, %v319
  %321 = vmatmul.f32.gmra.mxu0 %v248
  %v322 = vpop.f32.mrf.mxu0
  %v323 = vadd.f32 %v285, %v322
  %324 = vdwg.mxu0
  %v325 = vmax.f32 %v227, %v305
  %v326 = vmax.f32 %v228, %v308
  %v327 = vmax.f32 %v229, %v311
  %v328 = vmax.f32 %v230, %v314
  %v329 = vmax.f32 %v231, %v317
  %v330 = vmax.f32 %v232, %v320
  %v331 = vmax.f32 %v233, %v323
  %s332 = scalar_lea.vmem %s0, 336
  %v333 = vld [vmem:[%s332] sm:$0xff]
  %v334 = vld [vmem:[%s332 + $0x8] sm:$0xff]
  %v335 = vld [vmem:[%s332 + $0x10] sm:$0xff]
  %v336 = vld [vmem:[%s332 + $0x18] sm:$0xff]
  %v337 = vld [vmem:[%s332 + $0x20] sm:$0xff]
  %v338 = vld [vmem:[%s332 + $0x28] sm:$0xff]
  %v339 = vld [vmem:[%s332 + $0x30] sm:$0xff]
  %v340 = vld [vmem:[%s332 + $0x38] sm:$0xff]
  %v341 = vld [vmem:[%s332 + $0x40] sm:$0xff]
  %v342 = vld [vmem:[%s332 + $0x48] sm:$0xff]
  %v343 = vld [vmem:[%s332 + $0x50] sm:$0xff]
  %v344 = vld [vmem:[%s332 + $0x58] sm:$0xff]
  %v345 = vld [vmem:[%s332 + $0x60] sm:$0xff]
  %v346 = vld [vmem:[%s332 + $0x68] sm:$0xff]
  %347 = vmatpush.msra.mxu0 %v29
  %348 = vmatpush.msra.mxu0 %v28
  %349 = vmatpush.msra.mxu0 %v27
  %350 = vmatpush.msra.mxu0 %v26
  %351 = vmatpush.msra.mxu0 %v25
  %352 = vmatpush.msra.mxu0 %v24
  %353 = vmatpush.msra.mxu0 %v23
  %354 = vmatpush.msra.mxu0 %v22
  %355 = vmatpush.msra.mxu0 %v21
  %356 = vmatpush.msra.mxu0 %v20
  %357 = vmatpush.msra.mxu0 %v19
  %358 = vmatpush.msra.mxu0 %v18
  %359 = vmatpush.msra.mxu0 %v17
  %360 = vmatpush.msra.mxu0 %v16
  %361 = vmatpush.msra.mxu0 %v15
  %362 = vmatpush.msra.mxu0 %v14
  %363 = vmatmul.f32.gmra.mxu0 %v333
  %v364 = vpop.f32.mrf.mxu0
  %v365 = vadd.f32 0.0, %v364
  %366 = vmatmul.f32.gmra.mxu0 %v335
  %v367 = vpop.f32.mrf.mxu0
  %v368 = vadd.f32 0.0, %v367
  %369 = vmatmul.f32.gmra.mxu0 %v337
  %v370 = vpop.f32.mrf.mxu0
  %v371 = vadd.f32 0.0, %v370
  %372 = vmatmul.f32.gmra.mxu0 %v339
  %v373 = vpop.f32.mrf.mxu0
  %v374 = vadd.f32 0.0, %v373
  %375 = vmatmul.f32.gmra.mxu0 %v341
  %v376 = vpop.f32.mrf.mxu0
  %v377 = vadd.f32 0.0, %v376
  %378 = vmatmul.f32.gmra.mxu0 %v343
  %v379 = vpop.f32.mrf.mxu0
  %v380 = vadd.f32 0.0, %v379
  %381 = vmatmul.f32.gmra.mxu0 %v345
  %v382 = vpop.f32.mrf.mxu0
  %v383 = vadd.f32 0.0, %v382
  %384 = vdwg.mxu0
  %385 = vmatpush.msra.mxu0 %v45
  %386 = vmatpush.msra.mxu0 %v44
  %387 = vmatpush.msra.mxu0 %v43
  %388 = vmatpush.msra.mxu0 %v42
  %389 = vmatpush.msra.mxu0 %v41
  %390 = vmatpush.msra.mxu0 %v40
  %391 = vmatpush.msra.mxu0 %v39
  %392 = vmatpush.msra.mxu0 %v38
  %393 = vmatpush.msra.mxu0 %v37
  %394 = vmatpush.msra.mxu0 %v36
  %395 = vmatpush.msra.mxu0 %v35
  %396 = vmatpush.msra.mxu0 %v34
  %397 = vmatpush.msra.mxu0 %v33
  %398 = vmatpush.msra.mxu0 %v32
  %399 = vmatpush.msra.mxu0 %v31
  %400 = vmatpush.msra.mxu0 %v30
  %401 = vmatmul.f32.gmra.mxu0 %v334
  %v402 = vpop.f32.mrf.mxu0
  %v403 = vadd.f32 %v365, %v402
  %404 = vmatmul.f32.gmra.mxu0 %v336
  %v405 = vpop.f32.mrf.mxu0
  %v406 = vadd.f32 %v368, %v405
  %407 = vmatmul.f32.gmra.mxu0 %v338
  %v408 = vpop.f32.mrf.mxu0
  %v409 = vadd.f32 %v371, %v408
  %410 = vmatmul.f32.gmra.mxu0 %v340
  %v411 = vpop.f32.mrf.mxu0
  %v412 = vadd.f32 %v374, %v411
  %413 = vmatmul.f32.gmra.mxu0 %v342
  %v414 = vpop.f32.mrf.mxu0
  %v415 = vadd.f32 %v377, %v414
  %416 = vmatmul.f32.gmra.mxu0 %v344
  %v417 = vpop.f32.mrf.mxu0
  %v418 = vadd.f32 %v380, %v417
  %419 = vmatmul.f32.gmra.mxu0 %v346
  %v420 = vpop.f32.mrf.mxu0
  %v421 = vadd.f32 %v383, %v420
  %422 = vdwg.mxu0
  %v423 = vmax.f32 %v325, %v403
  %v424 = vmax.f32 %v326, %v406
  %v425 = vmax.f32 %v327, %v409
  %v426 = vmax.f32 %v328, %v412
  %v427 = vmax.f32 %v329, %v415
  %v428 = vmax.f32 %v330, %v418
  %v429 = vmax.f32 %v331, %v421
  %v430 = vld [vmem:[%s2] sm:$0x1]
  %v432 = vperm.slane %v430, 0
  %v434 = vadd.f32 %v423, %v432
  %v435 = vadd.f32 %v424, %v432
  %v436 = vadd.f32 %v425, %v432
  %v437 = vadd.f32 %v426, %v432
  %v438 = vadd.f32 %v427, %v432
  %v439 = vadd.f32 %v428, %v432
  %v440 = vadd.f32 %v429, %v432
  %v441 = vmax.f32 %v434, 0.0
  %v442 = vmax.f32 %v435, 0.0
  %v443 = vmax.f32 %v436, 0.0
  %v444 = vmax.f32 %v437, 0.0
  %v445 = vmax.f32 %v438, 0.0
  %v446 = vmax.f32 %v439, 0.0
  %v447 = vmax.f32 %v440, 0.0
  %448 = vst [vmem:[%s3] sm:$0xff] %v441
  %449 = vst [vmem:[%s3 + $0x8] sm:$0xff] %v442
  %450 = vst [vmem:[%s3 + $0x10] sm:$0xff] %v443
  %451 = vst [vmem:[%s3 + $0x18] sm:$0xff] %v444
  %452 = vst [vmem:[%s3 + $0x20] sm:$0xff] %v445
  %453 = vst [vmem:[%s3 + $0x28] sm:$0xff] %v446
  %454 = vst [vmem:[%s3 + $0x30] sm:$0xff] %v447
  // Predicated region
  $region14: #{neural_net_forward.4} parent=0 // pred_check
    _
  $region15: #{neural_net_forward.4} parent=0 // pred_check_branch
    %456 = sbr.rel (0) target = $region17
  $region16: #{neural_net_forward.4} parent=0 // pred_region
    _
  $region17: #{neural_net_forward.4} parent=0 // pred_fallthru
    _
  // Predicated region
  $region18: #{neural_net_forward.4} parent=0 // pred_check
    _
  $region19: #{neural_net_forward.4} parent=0 // pred_check_branch
    %458 = sbr.rel (0) target = $region21
  $region20: #{neural_net_forward.4} parent=0 // pred_region
    _
  $region21: #{neural_net_forward.4} parent=0 // pred_fallthru
    _

// kernel: neural_net_forward.5
$region0: #{neural_net_forward.5}
  #allocation0 [shape = 'u32[]', space=smem, size = 0x4, offset = 0x4, fixed_abs, tag = 'smem constant byte address 0x4 - core index']
  #allocation1 [shape = 'u32[72,128]{1,0:T(1,128)}', space=vmem, size = 0x9000, scoped, tag = 'internal scratch']
  %s0 = inlined_call_operand.vmem [shape: f32[8,512], index: 0, kind: input, shape index: {}]
  %s1 = inlined_call_operand.vmem [shape: f32[512,128], index: 1, kind: input, shape index: {}]
  %s2 = inlined_call_operand.vmem [shape: f32[1,128], index: 2, kind: input, shape index: {}]
  %s3 = inlined_call_operand.vmem [shape: f32[128,128], index: 3, kind: input, shape index: {}]
  %s4 = inlined_call_operand.vmem [shape: f32[1,128], index: 4, kind: input, shape index: {}]
  %s5 = inlined_call_operand.vmem [shape: f32[128,128], index: 5, kind: input, shape index: {}]
  %s6 = inlined_call_operand.vmem [shape: f32[1,128], index: 6, kind: input, shape index: {}]
  %s7 = inlined_call_operand.vmem [shape: f32[8,128], index: 7, kind: output, shape index: {}]
  %s8 = sld [smem:[#allocation0]]
  $region38: #{neural_net_forward.5} parent=0
    _
  %s10 = ssub.s32 1, %s8
  %s11 = scalar_select 0, %s10, %s8
  // Predicated region
  $region2: #{neural_net_forward.5} parent=0 // pred_check
    _
  $region3: #{neural_net_forward.5} parent=0 // pred_check_branch
    %13 = sbr.rel (0) target = $region5
  $region4: #{neural_net_forward.5} parent=0 // pred_region
    _
  $region5: #{neural_net_forward.5} parent=0 // pred_fallthru
    _
  // Predicated region
  $region6: #{neural_net_forward.5} parent=0 // pred_check
    _
  $region7: #{neural_net_forward.5} parent=0 // pred_check_branch
    %15 = sbr.rel (0) target = $region9
  $region8: #{neural_net_forward.5} parent=0 // pred_region
    _
  $region9: #{neural_net_forward.5} parent=0 // pred_fallthru
    _
  // Predicated region
  $region10: #{neural_net_forward.5} parent=0 // pred_check
    _
  $region11: #{neural_net_forward.5} parent=0 // pred_check_branch
    %17 = sbr.rel (0) target = $region13
  $region12: #{neural_net_forward.5} parent=0 // pred_region
    _
  $region13: #{neural_net_forward.5} parent=0 // pred_fallthru
    _
  // Predicated region
  $region14: #{neural_net_forward.5} parent=0 // pred_check
    _
  $region15: #{neural_net_forward.5} parent=0 // pred_check_branch
    %19 = sbr.rel (0) target = $region17
  $region16: #{neural_net_forward.5} parent=0 // pred_region
    _
  $region17: #{neural_net_forward.5} parent=0 // pred_fallthru
    _
  // Predicated region
  $region18: #{neural_net_forward.5} parent=0 // pred_check
    _
  $region19: #{neural_net_forward.5} parent=0 // pred_check_branch
    %21 = sbr.rel (0) target = $region21
  $region20: #{neural_net_forward.5} parent=0 // pred_region
    _
  $region21: #{neural_net_forward.5} parent=0 // pred_fallthru
    _
  // Predicated region
  $region22: #{neural_net_forward.5} parent=0 // pred_check
    _
  $region23: #{neural_net_forward.5} parent=0 // pred_check_branch
    %23 = sbr.rel (0) target = $region25
  $region24: #{neural_net_forward.5} parent=0 // pred_region
    _
  $region25: #{neural_net_forward.5} parent=0 // pred_fallthru
    _
  // Predicated region
  $region26: #{neural_net_forward.5} parent=0 // pred_check
    _
  $region27: #{neural_net_forward.5} parent=0 // pred_check_branch
    %25 = sbr.rel (0) target = $region29
  $region28: #{neural_net_forward.5} parent=0 // pred_region
    _
  $region29: #{neural_net_forward.5} parent=0 // pred_fallthru
    _
  %v26 = vld [vmem:[%s0] sm:$0xff]
  %v27 = vld [vmem:[%s0 + $0x8] sm:$0xff]
  %v28 = vld [vmem:[%s0 + $0x10] sm:$0xff]
  %v29 = vld [vmem:[%s0 + $0x18] sm:$0xff]
  %v30 = vld [vmem:[%s1] sm:$0xff]
  %v31 = vld [vmem:[%s1 + $0x8] sm:$0xff]
  %v32 = vld [vmem:[%s1 + $0x10] sm:$0xff]
  %v33 = vld [vmem:[%s1 + $0x18] sm:$0xff]
  %v34 = vld [vmem:[%s1 + $0x20] sm:$0xff]
  %v35 = vld [vmem:[%s1 + $0x28] sm:$0xff]
  %v36 = vld [vmem:[%s1 + $0x30] sm:$0xff]
  %v37 = vld [vmem:[%s1 + $0x38] sm:$0xff]
  %v38 = vld [vmem:[%s1 + $0x40] sm:$0xff]
  %v39 = vld [vmem:[%s1 + $0x48] sm:$0xff]
  %v40 = vld [vmem:[%s1 + $0x50] sm:$0xff]
  %v41 = vld [vmem:[%s1 + $0x58] sm:$0xff]
  %v42 = vld [vmem:[%s1 + $0x60] sm:$0xff]
  %v43 = vld [vmem:[%s1 + $0x68] sm:$0xff]
  %v44 = vld [vmem:[%s1 + $0x70] sm:$0xff]
  %v45 = vld [vmem:[%s1 + $0x78] sm:$0xff]
  %v46 = vld [vmem:[%s1 + $0x80] sm:$0xff]
  %v47 = vld [vmem:[%s1 + $0x88] sm:$0xff]
  %v48 = vld [vmem:[%s1 + $0x90] sm:$0xff]
  %v49 = vld [vmem:[%s1 + $0x98] sm:$0xff]
  %v50 = vld [vmem:[%s1 + $0xa0] sm:$0xff]
  %v51 = vld [vmem:[%s1 + $0xa8] sm:$0xff]
  %v52 = vld [vmem:[%s1 + $0xb0] sm:$0xff]
  %v53 = vld [vmem:[%s1 + $0xb8] sm:$0xff]
  %v54 = vld [vmem:[%s1 + $0xc0] sm:$0xff]
  %v55 = vld [vmem:[%s1 + $0xc8] sm:$0xff]
  %v56 = vld [vmem:[%s1 + $0xd0] sm:$0xff]
  %v57 = vld [vmem:[%s1 + $0xd8] sm:$0xff]
  %v58 = vld [vmem:[%s1 + $0xe0] sm:$0xff]
  %v59 = vld [vmem:[%s1 + $0xe8] sm:$0xff]
  %v60 = vld [vmem:[%s1 + $0xf0] sm:$0xff]
  %v61 = vld [vmem:[%s1 + $0xf8] sm:$0xff]
  %v62 = vld [vmem:[%s1 + $0x100] sm:$0xff]
  %v63 = vld [vmem:[%s1 + $0x108] sm:$0xff]
  %v64 = vld [vmem:[%s1 + $0x110] sm:$0xff]
  %v65 = vld [vmem:[%s1 + $0x118] sm:$0xff]
  %v66 = vld [vmem:[%s1 + $0x120] sm:$0xff]
  %v67 = vld [vmem:[%s1 + $0x128] sm:$0xff]
  %v68 = vld [vmem:[%s1 + $0x130] sm:$0xff]
  %v69 = vld [vmem:[%s1 + $0x138] sm:$0xff]
  %v70 = vld [vmem:[%s1 + $0x140] sm:$0xff]
  %v71 = vld [vmem:[%s1 + $0x148] sm:$0xff]
  %v72 = vld [vmem:[%s1 + $0x150] sm:$0xff]
  %v73 = vld [vmem:[%s1 + $0x158] sm:$0xff]
  %v74 = vld [vmem:[%s1 + $0x160] sm:$0xff]
  %v75 = vld [vmem:[%s1 + $0x168] sm:$0xff]
  %v76 = vld [vmem:[%s1 + $0x170] sm:$0xff]
  %v77 = vld [vmem:[%s1 + $0x178] sm:$0xff]
  %v78 = vld [vmem:[%s1 + $0x180] sm:$0xff]
  %v79 = vld [vmem:[%s1 + $0x188] sm:$0xff]
  %v80 = vld [vmem:[%s1 + $0x190] sm:$0xff]
  %v81 = vld [vmem:[%s1 + $0x198] sm:$0xff]
  %v82 = vld [vmem:[%s1 + $0x1a0] sm:$0xff]
  %v83 = vld [vmem:[%s1 + $0x1a8] sm:$0xff]
  %v84 = vld [vmem:[%s1 + $0x1b0] sm:$0xff]
  %v85 = vld [vmem:[%s1 + $0x1b8] sm:$0xff]
  %v86 = vld [vmem:[%s1 + $0x1c0] sm:$0xff]
  %v87 = vld [vmem:[%s1 + $0x1c8] sm:$0xff]
  %v88 = vld [vmem:[%s1 + $0x1d0] sm:$0xff]
  %v89 = vld [vmem:[%s1 + $0x1d8] sm:$0xff]
  %v90 = vld [vmem:[%s1 + $0x1e0] sm:$0xff]
  %v91 = vld [vmem:[%s1 + $0x1e8] sm:$0xff]
  %v92 = vld [vmem:[%s1 + $0x1f0] sm:$0xff]
  %v93 = vld [vmem:[%s1 + $0x1f8] sm:$0xff]
  %v94 = vld [vmem:[%s2] sm:$0x1]
  %v96 = vperm.slane %v94, 0
  %98 = vmatpush.msra.mxu0 %v45
  %99 = vmatpush.msra.mxu0 %v44
  %100 = vmatpush.msra.mxu0 %v43
  %101 = vmatpush.msra.mxu0 %v42
  %102 = vmatpush.msra.mxu0 %v41
  %103 = vmatpush.msra.mxu0 %v40
  %104 = vmatpush.msra.mxu0 %v39
  %105 = vmatpush.msra.mxu0 %v38
  %106 = vmatpush.msra.mxu0 %v37
  %107 = vmatpush.msra.mxu0 %v36
  %108 = vmatpush.msra.mxu0 %v35
  %109 = vmatpush.msra.mxu0 %v34
  %110 = vmatpush.msra.mxu0 %v33
  %111 = vmatpush.msra.mxu0 %v32
  %112 = vmatpush.msra.mxu0 %v31
  %113 = vmatpush.msra.mxu0 %v30
  %114 = vmatmul.f32.gmra.mxu0 %v26
  %v115 = vpop.f32.mrf.mxu0
  %v116 = vadd.f32 %v96, %v115
  %117 = vdwg.mxu0
  %118 = vmatpush.msra.mxu0 %v61
  %119 = vmatpush.msra.mxu0 %v60
  %120 = vmatpush.msra.mxu0 %v59
  %121 = vmatpush.msra.mxu0 %v58
  %122 = vmatpush.msra.mxu0 %v57
  %123 = vmatpush.msra.mxu0 %v56
  %124 = vmatpush.msra.mxu0 %v55
  %125 = vmatpush.msra.mxu0 %v54
  %126 = vmatpush.msra.mxu0 %v53
  %127 = vmatpush.msra.mxu0 %v52
  %128 = vmatpush.msra.mxu0 %v51
  %129 = vmatpush.msra.mxu0 %v50
  %130 = vmatpush.msra.mxu0 %v49
  %131 = vmatpush.msra.mxu0 %v48
  %132 = vmatpush.msra.mxu0 %v47
  %133 = vmatpush.msra.mxu0 %v46
  %134 = vmatmul.f32.gmra.mxu0 %v27
  %v135 = vpop.f32.mrf.mxu0
  %v136 = vadd.f32 %v116, %v135
  %137 = vdwg.mxu0
  %138 = vmatpush.msra.mxu0 %v77
  %139 = vmatpush.msra.mxu0 %v76
  %140 = vmatpush.msra.mxu0 %v75
  %141 = vmatpush.msra.mxu0 %v74
  %142 = vmatpush.msra.mxu0 %v73
  %143 = vmatpush.msra.mxu0 %v72
  %144 = vmatpush.msra.mxu0 %v71
  %145 = vmatpush.msra.mxu0 %v70
  %146 = vmatpush.msra.mxu0 %v69
  %147 = vmatpush.msra.mxu0 %v68
  %148 = vmatpush.msra.mxu0 %v67
  %149 = vmatpush.msra.mxu0 %v66
  %150 = vmatpush.msra.mxu0 %v65
  %151 = vmatpush.msra.mxu0 %v64
  %152 = vmatpush.msra.mxu0 %v63
  %153 = vmatpush.msra.mxu0 %v62
  %154 = vmatmul.f32.gmra.mxu0 %v28
  %v155 = vpop.f32.mrf.mxu0
  %v156 = vadd.f32 %v136, %v155
  %157 = vdwg.mxu0
  %158 = vmatpush.msra.mxu0 %v93
  %159 = vmatpush.msra.mxu0 %v92
  %160 = vmatpush.msra.mxu0 %v91
  %161 = vmatpush.msra.mxu0 %v90
  %162 = vmatpush.msra.mxu0 %v89
  %163 = vmatpush.msra.mxu0 %v88
  %164 = vmatpush.msra.mxu0 %v87
  %165 = vmatpush.msra.mxu0 %v86
  %166 = vmatpush.msra.mxu0 %v85
  %167 = vmatpush.msra.mxu0 %v84
  %168 = vmatpush.msra.mxu0 %v83
  %169 = vmatpush.msra.mxu0 %v82
  %170 = vmatpush.msra.mxu0 %v81
  %171 = vmatpush.msra.mxu0 %v80
  %172 = vmatpush.msra.mxu0 %v79
  %173 = vmatpush.msra.mxu0 %v78
  %174 = vmatmul.f32.gmra.mxu0 %v29
  %v175 = vpop.f32.mrf.mxu0
  %v176 = vadd.f32 %v156, %v175
  %177 = vdwg.mxu0
  %v178 = vmax.f32 %v176, 0.0
  %v179 = vld [vmem:[%s3] sm:$0xff]
  %v180 = vld [vmem:[%s3 + $0x8] sm:$0xff]
  %v181 = vld [vmem:[%s3 + $0x10] sm:$0xff]
  %v182 = vld [vmem:[%s3 + $0x18] sm:$0xff]
  %v183 = vld [vmem:[%s3 + $0x20] sm:$0xff]
  %v184 = vld [vmem:[%s3 + $0x28] sm:$0xff]
  %v185 = vld [vmem:[%s3 + $0x30] sm:$0xff]
  %v186 = vld [vmem:[%s3 + $0x38] sm:$0xff]
  %v187 = vld [vmem:[%s3 + $0x40] sm:$0xff]
  %v188 = vld [vmem:[%s3 + $0x48] sm:$0xff]
  %v189 = vld [vmem:[%s3 + $0x50] sm:$0xff]
  %v190 = vld [vmem:[%s3 + $0x58] sm:$0xff]
  %v191 = vld [vmem:[%s3 + $0x60] sm:$0xff]
  %v192 = vld [vmem:[%s3 + $0x68] sm:$0xff]
  %v193 = vld [vmem:[%s3 + $0x70] sm:$0xff]
  %v194 = vld [vmem:[%s3 + $0x78] sm:$0xff]
  %v195 = vld [vmem:[%s4] sm:$0x1]
  %v197 = vperm.slane %v195, 0
  %199 = vmatpush.msra.mxu0 %v194
  %200 = vmatpush.msra.mxu0 %v193
  %201 = vmatpush.msra.mxu0 %v192
  %202 = vmatpush.msra.mxu0 %v191
  %203 = vmatpush.msra.mxu0 %v190
  %204 = vmatpush.msra.mxu0 %v189
  %205 = vmatpush.msra.mxu0 %v188
  %206 = vmatpush.msra.mxu0 %v187
  %207 = vmatpush.msra.mxu0 %v186
  %208 = vmatpush.msra.mxu0 %v185
  %209 = vmatpush.msra.mxu0 %v184
  %210 = vmatpush.msra.mxu0 %v183
  %211 = vmatpush.msra.mxu0 %v182
  %212 = vmatpush.msra.mxu0 %v181
  %213 = vmatpush.msra.mxu0 %v180
  %214 = vmatpush.msra.mxu0 %v179
  %215 = vmatmul.f32.gmra.mxu0 %v178
  %v216 = vpop.f32.mrf.mxu0
  %v217 = vadd.f32 %v197, %v216
  %218 = vdwg.mxu0
  %v219 = vmax.f32 %v217, 0.0
  %v220 = vld [vmem:[%s5] sm:$0xff]
  %v221 = vld [vmem:[%s5 + $0x8] sm:$0xff]
  %v222 = vld [vmem:[%s5 + $0x10] sm:$0xff]
  %v223 = vld [vmem:[%s5 + $0x18] sm:$0xff]
  %v224 = vld [vmem:[%s5 + $0x20] sm:$0xff]
  %v225 = vld [vmem:[%s5 + $0x28] sm:$0xff]
  %v226 = vld [vmem:[%s5 + $0x30] sm:$0xff]
  %v227 = vld [vmem:[%s5 + $0x38] sm:$0xff]
  %v228 = vld [vmem:[%s5 + $0x40] sm:$0xff]
  %v229 = vld [vmem:[%s5 + $0x48] sm:$0xff]
  %v230 = vld [vmem:[%s5 + $0x50] sm:$0xff]
  %v231 = vld [vmem:[%s5 + $0x58] sm:$0xff]
  %v232 = vld [vmem:[%s5 + $0x60] sm:$0xff]
  %v233 = vld [vmem:[%s5 + $0x68] sm:$0xff]
  %v234 = vld [vmem:[%s5 + $0x70] sm:$0xff]
  %v235 = vld [vmem:[%s5 + $0x78] sm:$0xff]
  %v236 = vld [vmem:[%s6] sm:$0x1]
  %v238 = vperm.slane %v236, 0
  %240 = vmatpush.msra.mxu0 %v235
  %241 = vmatpush.msra.mxu0 %v234
  %242 = vmatpush.msra.mxu0 %v233
  %243 = vmatpush.msra.mxu0 %v232
  %244 = vmatpush.msra.mxu0 %v231
  %245 = vmatpush.msra.mxu0 %v230
  %246 = vmatpush.msra.mxu0 %v229
  %247 = vmatpush.msra.mxu0 %v228
  %248 = vmatpush.msra.mxu0 %v227
  %249 = vmatpush.msra.mxu0 %v226
  %250 = vmatpush.msra.mxu0 %v225
  %251 = vmatpush.msra.mxu0 %v224
  %252 = vmatpush.msra.mxu0 %v223
  %253 = vmatpush.msra.mxu0 %v222
  %254 = vmatpush.msra.mxu0 %v221
  %255 = vmatpush.msra.mxu0 %v220
  %256 = vmatmul.f32.gmra.mxu0 %v219
  %v257 = vpop.f32.mrf.mxu0
  %v258 = vadd.f32 %v238, %v257
  %259 = vdwg.mxu0
  %260 = vst [vmem:[%s7] sm:$0xff] %v258
  // Predicated region
  $region30: #{neural_net_forward.5} parent=0 // pred_check
    _
  $region31: #{neural_net_forward.5} parent=0 // pred_check_branch
    %262 = sbr.rel (0) target = $region33
  $region32: #{neural_net_forward.5} parent=0 // pred_region
    _
  $region33: #{neural_net_forward.5} parent=0 // pred_fallthru
    _
  // Predicated region
  $region34: #{neural_net_forward.5} parent=0 // pred_check
    _
  $region35: #{neural_net_forward.5} parent=0 // pred_check_branch
    %264 = sbr.rel (0) target = $region37
  $region36: #{neural_net_forward.5} parent=0 // pred_region
    _
  $region37: #{neural_net_forward.5} parent=0 // pred_fallthru
    _

</llo_original>
